<compile_context>
chip_gen: v7x
topology: tpu7x:2x2x1
jax: 0.10.0
libtpu: 0.0.40
codegen_flags: <defaults>
</compile_context>

<pallas_src>
import functools
import math

import jax
import jax.numpy as jnp
from jax import lax
from jax.experimental import pallas as pl
from jax.experimental.pallas import tpu as pltpu


def _round_up(x: int, m: int) -> int:
    return (x + m - 1) // m * m


def _pick_unroll(n: int) -> int:
    for u in (8, 4, 2):
        if n % u == 0:
            return u
    return 1


def sinusoidal_pos_embedding(d_model: int, max_len: int) -> jnp.ndarray:
    position = jnp.arange(max_len, dtype=jnp.float32)[:, None]
    div_term = jnp.exp(
        jnp.arange(0, d_model, 2, dtype=jnp.float32) * (-math.log(10000.0) / d_model))
    pe = jnp.zeros((max_len, d_model), jnp.float32)
    pe = pe.at[:, 0::2].set(jnp.sin(position * div_term))
    pe = pe.at[:, 1::2].set(jnp.cos(position * div_term))
    return pe


def _joint_fertility_kernel(
    logits_ref,   # (S, Bb, F+1)   fertility-linear output (pre temperature / pre mask)
    maskf_ref,    # (S, Bb, 1)     input mask (1.0 = real token)
    tmaskf_ref,   # (Bb, T)        target mask
    fert_ref,     # (S, Bb, F+1)   out: fertility distributions
    joint_ref,    # (F+1, S, Bb, Tp) out: joint alignment (kernel-native layout)
    marg_ref,     # (S, Bb, Tp)    out: marginal alignment
    mp_ref,       # (F+1, Bb, Tp)  out: per-copy-index position marginals
    ll_ref,       # (Bb, 1)        out: log-likelihood
    pref_sc,      # scratch (S, Bb, lanes): pref[i, b, l] = P(sum_{j<i} f_j = l)
    rev_sc,       # scratch (S, Bb, lanes): rev[i, b, m] = P(sum_{j>i} f_j = L - m) / Z
    *, max_fert: int, temperature: float, seq_len: int, tgt_len: int,
    lanes: int, t_pad: int, row_chunk: int, unroll: int,
):
    f32 = jnp.float32
    Fp1 = max_fert + 1
    S, T, Lp, Tp = seq_len, tgt_len, lanes, t_pad
    max_l = T + 1                      # logical length axis (truncated at T + 1)
    Bb = tmaskf_ref.shape[0]

    # ---- fertilities: /temperature -> pad penalty -> softmax (Linear hoisted to XLA) ----
    logits = logits_ref[...] * (1.0 / temperature)
    maskf = maskf_ref[...]                                         # (S, Bb, 1)
    col = lax.broadcasted_iota(jnp.int32, (1, 1, Fp1), 2)
    penalty = jnp.where((col == 0) | (maskf > 0.5), 0.0, -10000.0)
    logits = logits + penalty
    logits = logits - jnp.max(logits, axis=2, keepdims=True)
    e = jnp.exp(logits)
    fert = e / jnp.sum(e, axis=2, keepdims=True)                   # (S, Bb, F+1)
    fert_ref[...] = fert

    # ---- hoisted lane iota / shift masks (batch lives on the sublane axis) -------------
    lane2 = lax.broadcasted_iota(jnp.int32, (1, Lp), 1)
    right_m2 = [None] + [jnp.broadcast_to((lane2 >= k).astype(f32), (Bb, Lp))
                         for k in range(1, Fp1)]
    left_m2 = [None] + [jnp.broadcast_to((lane2 < (max_l - k)).astype(f32), (Bb, Lp))
                        for k in range(1, Fp1)]

    def shr2(x, k):                     # result[.., l] = x[.., l - k], 0 for l < k
        return x if k == 0 else pltpu.roll(x, k, axis=1) * right_m2[k]

    def shl2(x, k):                     # result[.., l] = x[.., l + k], 0 past max_l
        return x if k == 0 else pltpu.roll(x, Lp - k, axis=1) * left_m2[k]

    # ---- forward scan: pref[i, b, l] = P(sum_{j<i} f_j = l) ----------------------------
    cur0 = jnp.broadcast_to((lane2 == 0).astype(f32), (Bb, Lp))

    def fwd_body(i, cur):
        pref_sc[i] = cur                                           # full-tile store
        frow = fert_ref[i]                                         # (Bb, F+1)
        new = frow[:, 0:1] * cur
        for k in range(1, Fp1):
            new = new + frow[:, k:k + 1] * shr2(cur, k)
        return new

    total = lax.fori_loop(0, S, fwd_body, cur0, unroll=unroll)     # P(sum_all = l)

    # ---- normalizer Z = P(sum_all = L) and log-likelihood ------------------------------
    L = jnp.sum(tmaskf_ref[...], axis=1, keepdims=True).astype(jnp.int32)   # (Bb, 1)
    onehot_L = (lane2 == L).astype(f32)                                     # (Bb, Lp)
    Z = jnp.sum(total * onehot_L, axis=1, keepdims=True)                    # (Bb, 1)
    ll_ref[...] = jnp.log(Z)                 # -inf if infeasible, like torch.log(0)
    inv_z = jnp.where(Z > 0.0, 1.0 / Z, 0.0)  # guard: joint/marginal become 0, no NaN

    # ---- backward scan directly on rev[i, b, m] = P(sum_{j>i} f_j = L - m) / Z ---------
    def bwd_body(s, cur):
        i = S - 1 - s
        rev_sc[i] = cur
        frow = fert_ref[i]
        new = frow[:, 0:1] * cur
        for k in range(1, Fp1):
            new = new + frow[:, k:k + 1] * shl2(cur, k)
        return new

    _ = lax.fori_loop(0, S, bwd_body, onehot_L * inv_z, unroll=unroll)

    # ---- joint / marginal alignment, S-chunked to bound live temporaries ---------------
    lane3 = lax.broadcasted_iota(jnp.int32, (1, 1, Lp), 2)
    mp_acc = [jnp.zeros((Bb, Lp), f32) for _ in range(Fp1)]

    for r0 in range(0, S, row_chunk):
        rc = min(row_chunk, S - r0)
        shp = (rc, Bb, Lp)
        right_m3 = [None] + [jnp.broadcast_to((lane3 >= k).astype(f32), shp)
                             for k in range(1, Fp1)]
        left1_m3 = jnp.broadcast_to((lane3 < (max_l - 1)).astype(f32), shp)

        pref_ch = pref_sc[r0:r0 + rc]                              # (rc, Bb, Lp)
        rev_ch = rev_sc[r0:r0 + rc]                                # (rc, Bb, Lp)
        fert_ch = fert_ref[r0:r0 + rc]                             # (rc, Bb, F+1)

        marg_ch = jnp.zeros(shp, f32)
        s_cur = jnp.zeros(shp, f32)    # S_c[.., t] = sum_{d>=1} f[c+d] * rev[.., t+d]
        for c in range(Fp1 - 1, -1, -1):
            if c + 1 < Fp1:
                s_cur = pltpu.roll(fert_ch[:, :, c + 1:c + 2] * rev_ch + s_cur,
                                   Lp - 1, axis=2) * left1_m3
            if c == 0:
                a_c = pref_ch
            else:
                a_c = pltpu.roll(pref_ch, c, axis=2) * right_m3[c]
            joint_c = a_c * s_cur                                  # already / Z via rev
            joint_ref[c, r0:r0 + rc] = joint_c[:, :, :Tp].astype(joint_ref.dtype)
            marg_ch = marg_ch + joint_c
            mp_acc[c] = mp_acc[c] + jnp.sum(joint_c, axis=0)
        marg_ref[r0:r0 + rc] = marg_ch[:, :, :Tp]

    for c in range(Fp1):
        mp_ref[c] = mp_acc[c][:, :Tp]


def _vmem_block_bytes(shape, itemsize=4):
    dims = list(shape)
    if len(dims) >= 2:
        dims[-1] = _round_up(dims[-1], 128)
        dims[-2] = _round_up(dims[-2], 8)
    n = 1
    for d in dims:
        n *= d
    return n * itemsize


def joint_fertility_forward(inputs_q, input_mask, target_mask, params, *,
                            max_fert, temperature=1.0, block_b=8,
                            joint_dtype=jnp.float32, matmul_dtype=None,
                            joint_layout="bstf", row_chunk=None):
    B, S, D = inputs_q.shape
    T = target_mask.shape[1]
    Fp1 = max_fert + 1
    lanes = _round_up(T + 1, 128)           # internal, lane-padded length axis
    Tp = _round_up(T, 128)                  # lane-dense output length axis

    joint_itemsize = jnp.dtype(joint_dtype).itemsize
    min_b = 16 if joint_itemsize == 2 else 8
    Bb = _round_up(max(int(block_b), min_b), min_b)
    Bpad = _round_up(B, Bb)
    rc = max(1, min(int(row_chunk) if row_chunk is not None else 128, S))
    unroll = _pick_unroll(S)

    q32 = inputs_q.astype(jnp.float32)
    W = params["fert_w"].astype(jnp.float32)                        # (D, F+1)
    bias = params["fert_b"].astype(jnp.float32).reshape(1, 1, Fp1)
    pos = params["pos_emb"].astype(jnp.float32)                     # (F+1, D)

    # Fertility Linear hoisted to XLA (MXU-poor N=F+1 matmul, per the review).
    logits = jnp.einsum("bsd,df->bsf", q32, W) + bias               # (B, S, F+1)
    logits_s = jnp.transpose(logits, (1, 0, 2))                     # (S, B, F+1)
    maskf_s = jnp.transpose(input_mask.astype(jnp.float32), (1, 0))[:, :, None]  # (S,B,1)
    tmaskf = target_mask.astype(jnp.float32)                        # (B, T)

    if Bpad != B:      # padded rows: all-pad input, L = 0 (finite, sliced off below)
        pad = Bpad - B
        logits_s = jnp.pad(logits_s, ((0, 0), (0, pad), (0, 0)))
        maskf_s = jnp.pad(maskf_s, ((0, 0), (0, pad), (0, 0)))
        tmaskf = jnp.pad(tmaskf, ((0, pad), (0, 0)))

    kern = functools.partial(
        _joint_fertility_kernel, max_fert=max_fert, temperature=temperature,
        seq_len=S, tgt_len=T, lanes=lanes, t_pad=Tp, row_chunk=rc, unroll=unroll)

    out_shape = (
        jax.ShapeDtypeStruct((S, Bpad, Fp1), jnp.float32),          # fertilities
        jax.ShapeDtypeStruct((Fp1, S, Bpad, Tp), joint_dtype),      # joint (native layout)
        jax.ShapeDtypeStruct((S, Bpad, Tp), jnp.float32),           # marginal
        jax.ShapeDtypeStruct((Fp1, Bpad, Tp), jnp.float32),         # position marginals
        jax.ShapeDtypeStruct((Bpad, 1), jnp.float32),               # log-likelihood
    )
    grid_spec = pltpu.PrefetchScalarGridSpec(
        num_scalar_prefetch=0,
        grid=(Bpad // Bb,),
        in_specs=[
            pl.BlockSpec((S, Bb, Fp1), lambda g: (0, g, 0)),
            pl.BlockSpec((S, Bb, 1), lambda g: (0, g, 0)),
            pl.BlockSpec((Bb, T), lambda g: (g, 0)),
        ],
        out_specs=[
            pl.BlockSpec((S, Bb, Fp1), lambda g: (0, g, 0)),
            pl.BlockSpec((Fp1, S, Bb, Tp), lambda g: (0, 0, g, 0)),
            pl.BlockSpec((S, Bb, Tp), lambda g: (0, g, 0)),
            pl.BlockSpec((Fp1, Bb, Tp), lambda g: (0, g, 0)),
            pl.BlockSpec((Bb, 1), lambda g: (g, 0)),
        ],
        scratch_shapes=[
            pltpu.VMEM((S, Bb, lanes), jnp.float32),   # prefix DP table
            pltpu.VMEM((S, Bb, lanes), jnp.float32),   # (suffix at L - m) / Z DP table
        ],
    )

    # vmem_limit_bytes from the actual footprint, capped by physical VMEM.
    block_bytes = 2 * (
        _vmem_block_bytes((S, Bb, Fp1)) + _vmem_block_bytes((S, Bb, 1))
        + _vmem_block_bytes((Bb, T))
        + _vmem_block_bytes((S, Bb, Fp1))
        + _vmem_block_bytes((Fp1, S, Bb, Tp), joint_itemsize)
        + _vmem_block_bytes((S, Bb, Tp)) + _vmem_block_bytes((Fp1, Bb, Tp))
        + _vmem_block_bytes((Bb, 1)))
    scratch_bytes = 2 * _vmem_block_bytes((S, Bb, lanes))
    temp_bytes = 8 * _vmem_block_bytes((rc, Bb, lanes))
    need = block_bytes + scratch_bytes + temp_bytes + (2 << 20)
    try:
        cap = int(pltpu.get_tpu_info().vmem_capacity_bytes)
    except Exception:
        cap = 64 << 20
    vmem_limit = int(min(max(int(need * 1.25), 32 << 20), max(cap - (4 << 20), 32 << 20)))

    fert_raw, joint_raw, marg_raw, mp_raw, ll_raw = pl.pallas_call(
        kern,
        out_shape=out_shape,
        grid_spec=grid_spec,
        compiler_params=pltpu.CompilerParams(
            dimension_semantics=("parallel",),
            vmem_limit_bytes=vmem_limit),
    )(logits_s, maskf_s, tmaskf)

    # ---- wrapper-side layout fixups + the two bmms (XLA) --------------------------------
    fert = jnp.transpose(fert_raw[:, :B, :], (1, 0, 2))             # (B, S, F+1)
    marg = jnp.transpose(marg_raw[:, :B, :T], (1, 2, 0))            # (B, T, S)
    mp = mp_raw[:, :B, :T]                                          # (F+1, B, T)
    ll = ll_raw[:B, 0]                                              # (B,)

    if matmul_dtype is not None:                                    # bf16 MXU path (v6e/v7x)
        out = jnp.einsum("bts,bsd->btd", marg.astype(matmul_dtype),
                         q32.astype(matmul_dtype),
                         preferred_element_type=jnp.float32)
        pos_info = jnp.einsum("fbt,fd->btd", mp.astype(matmul_dtype),
                              pos.astype(matmul_dtype),
                              preferred_element_type=jnp.float32)
    else:
        out = jnp.einsum("bts,bsd->btd", marg, q32)                 # inputs_v == inputs_q
        pos_info = jnp.einsum("fbt,fd->btd", mp, pos)
    output = out + pos_info                                         # positional_mode='sum'

    joint = joint_raw[:, :, :B, :T]                                 # (F+1, S, B, T)
    if joint_layout == "bstf":          # PyTorch-parity layout
        joint = jnp.transpose(joint, (2, 1, 3, 0))                  # (B, S, T, F+1)
    elif joint_layout == "bfst":
        joint = jnp.transpose(joint, (2, 0, 1, 3))                  # (B, F+1, S, T)
    elif joint_layout != "fsbt":        # "fsbt" = kernel-native, zero-copy
        raise ValueError("joint_layout must be 'bstf', 'bfst' or 'fsbt'")

    return {
        "output": output,                       # (B, T, D)
        "joint_alignment": joint,               # (B, S, T, F+1) by default
        "marginal_alignment": marg,             # (B, T, S)
        "fertilities": fert,                    # (B, S, F+1)
        "log_likelihood": ll,                   # (B,)
    }


if __name__ == "__main__":
    B, S, D, T = 2, 8, 32, 10
    max_fert = 3          # maximum_fertility
    Fp1 = max_fert + 1

    key = jax.random.PRNGKey(0)
    k1, k2, k3 = jax.random.split(key, 3)
    inputs_q = jax.random.normal(k1, (B, S, D), jnp.float32)
    input_mask = jnp.array([[1] * 8, [1] * 6 + [0] * 2], jnp.int32)
    target_mask = jnp.array([[1] * 7 + [0] * 3, [1] * 5 + [0] * 5], jnp.int32)

    # fertility_layer = torch.nn.Linear(input_dim, maximum_fertility + 1) (default init)
    bound = 1.0 / math.sqrt(D)
    params = {
        "fert_w": jax.random.uniform(k2, (D, Fp1), jnp.float32, -bound, bound),
        "fert_b": jax.random.uniform(k3, (Fp1,), jnp.float32, -bound, bound),
        # sinusoidal=True, positional_dim=input_dim, positional_mode='sum'
        "pos_emb": sinusoidal_pos_embedding(D, Fp1),
    }

    ret = joint_fertility_forward(inputs_q, input_mask, target_mask, params,
                                  max_fert=max_fert, temperature=1.0)
    ret = jax.block_until_ready(ret)

    # sanity: in-length target positions fully aligned, pads get zero mass, joint sums
    # to the marginal, fertilities are distributions, log-likelihood finite.
    import numpy as np
    marg = np.asarray(ret["marginal_alignment"])          # (B, T, S)
    joint = np.asarray(ret["joint_alignment"])            # (B, S, T, F+1)
    lengths = np.asarray(target_mask.sum(axis=1))
    for b in range(B):
        s = marg[b].sum(axis=-1)
        assert np.allclose(s[: lengths[b]], 1.0, atol=1e-3), s
        assert np.allclose(s[lengths[b]:], 0.0, atol=1e-3), s
    assert joint.shape == (B, S, T, Fp1)
    assert np.allclose(joint.sum(-1).transpose(0, 2, 1), marg, atol=1e-5)
    assert ret["output"].shape == (B, T, D)
    assert np.all(np.isfinite(np.asarray(ret["log_likelihood"])))
    assert np.allclose(np.asarray(ret["fertilities"]).sum(-1), 1.0, atol=1e-3)

    print("KERNEL_OK")
</pallas_src>

<mosaic_0001>
module attributes {stable_mosaic.version = 11 : i64} {
  func.func @_joint_fertility_kernel(%arg0: i32, %arg1: memref<8x8x4xf32, #tpu.memory_space<vmem>>, %arg2: memref<8x8x1xf32, #tpu.memory_space<vmem>>, %arg3: memref<8x10xf32, #tpu.memory_space<vmem>>, %arg4: memref<8x8x4xf32, #tpu.memory_space<vmem>>, %arg5: memref<4x8x8x128xf32, #tpu.memory_space<vmem>>, %arg6: memref<8x8x128xf32, #tpu.memory_space<vmem>>, %arg7: memref<4x8x128xf32, #tpu.memory_space<vmem>>, %arg8: memref<8x1xf32, #tpu.memory_space<vmem>>, %arg9: memref<8x8x128xf32, #tpu.memory_space<vmem>>, %arg10: memref<8x8x128xf32, #tpu.memory_space<vmem>>) attributes {dimension_semantics = [#tpu.dimension_semantics<parallel>], iteration_bounds = array<i64: 1>, scalar_prefetch = 0 : i64, scratch_operands = 2 : i64, tpu.core_type = #tpu.core_type<tc>, window_params = [{transform_indices = @transform_0, window_bounds = array<i64: 8, 8, 4>}, {transform_indices = @transform_1, window_bounds = array<i64: 8, 8, 1>}, {transform_indices = @transform_2, window_bounds = array<i64: 8, 10>}, {transform_indices = @transform_3, window_bounds = array<i64: 8, 8, 4>}, {transform_indices = @transform_4, window_bounds = array<i64: 4, 8, 8, 128>}, {transform_indices = @transform_5, window_bounds = array<i64: 8, 8, 128>}, {transform_indices = @transform_6, window_bounds = array<i64: 4, 8, 128>}, {transform_indices = @transform_7, window_bounds = array<i64: 8, 1>}]} {
    %c0 = arith.constant 0 : index
    %c0_0 = arith.constant 0 : index
    %c0_1 = arith.constant 0 : index
    %0 = vector.load %arg1[%c0, %c0_0, %c0_1] : memref<8x8x4xf32, #tpu.memory_space<vmem>>, vector<8x8x4xf32>
    %cst = arith.constant 1.000000e+00 : f32
    %1 = vector.broadcast %cst : f32 to vector<8x8x4xf32>
    %2 = arith.mulf %0, %1 : vector<8x8x4xf32>
    %c0_2 = arith.constant 0 : index
    %c0_3 = arith.constant 0 : index
    %c0_4 = arith.constant 0 : index
    %3 = vector.load %arg2[%c0_2, %c0_3, %c0_4] : memref<8x8x1xf32, #tpu.memory_space<vmem>>, vector<8x8x1xf32>
    %4 = tpu.iota {dimensions = array<i32: 2>} : vector<1x1x4xi32>
    %c0_i32 = arith.constant 0 : i32
    %5 = vector.broadcast %c0_i32 : i32 to vector<1x1x4xi32>
    %6 = arith.cmpi eq, %4, %5 : vector<1x1x4xi32>
    %cst_5 = arith.constant 5.000000e-01 : f32
    %7 = vector.broadcast %cst_5 : f32 to vector<8x8x1xf32>
    %8 = arith.cmpf ogt, %3, %7 : vector<8x8x1xf32>
    %9 = vector.broadcast %6 : vector<1x1x4xi1> to vector<8x8x4xi1>
    %10 = vector.broadcast %8 : vector<8x8x1xi1> to vector<8x8x4xi1>
    %11 = arith.ori %9, %10 : vector<8x8x4xi1>
    %cst_6 = arith.constant 0.000000e+00 : f32
    %cst_7 = arith.constant -1.000000e+04 : f32
    %12 = vector.broadcast %cst_6 : f32 to vector<8x8x4xf32>
    %13 = vector.broadcast %cst_7 : f32 to vector<8x8x4xf32>
    %14 = arith.select %11, %12, %13 : vector<8x8x4xi1>, vector<8x8x4xf32>
    %15 = arith.addf %2, %14 : vector<8x8x4xf32>
    %cst_8 = arith.constant dense<0xFF800000> : vector<8x8xf32>
    %16 = vector.multi_reduction <maximumf>, %15, %cst_8 [2] : vector<8x8x4xf32> to vector<8x8xf32>
    %17 = vector.shape_cast %16 : vector<8x8xf32> to vector<8x8x1xf32>
    %18 = vector.broadcast %17 : vector<8x8x1xf32> to vector<8x8x4xf32>
    %19 = arith.subf %15, %18 : vector<8x8x4xf32>
    %20 = math.exp %19 : vector<8x8x4xf32>
    %cst_9 = arith.constant dense<0.000000e+00> : vector<8x8xf32>
    %21 = vector.multi_reduction <add>, %20, %cst_9 [2] : vector<8x8x4xf32> to vector<8x8xf32>
    %22 = vector.shape_cast %21 : vector<8x8xf32> to vector<8x8x1xf32>
    %23 = vector.broadcast %22 : vector<8x8x1xf32> to vector<8x8x4xf32>
    %24 = arith.divf %20, %23 : vector<8x8x4xf32>
    %c0_10 = arith.constant 0 : index
    %c0_11 = arith.constant 0 : index
    %c0_12 = arith.constant 0 : index
    %25 = vector.load %arg4[%c0_10, %c0_11, %c0_12] : memref<8x8x4xf32, #tpu.memory_space<vmem>>, vector<8x8x4xf32>
    tpu.vector_store %arg4[%c0_10, %c0_11, %c0_12], %24 {strides = array<i32>} : memref<8x8x4xf32, #tpu.memory_space<vmem>>, vector<8x8x4xf32>,
    %26 = tpu.iota {dimensions = array<i32: 1>} : vector<1x128xi32>
    %c1_i32 = arith.constant 1 : i32
    %27 = vector.broadcast %c1_i32 : i32 to vector<1x128xi32>
    %28 = arith.cmpi sge, %26, %27 : vector<1x128xi32>
    %29 = arith.extui %28 : vector<1x128xi1> to vector<1x128xi32>
    %30 = arith.sitofp %29 : vector<1x128xi32> to vector<1x128xf32>
    %31 = vector.shape_cast %30 : vector<1x128xf32> to vector<1x128xf32>
    %32 = vector.broadcast %31 : vector<1x128xf32> to vector<8x128xf32>
    %c2_i32 = arith.constant 2 : i32
    %33 = vector.broadcast %c2_i32 : i32 to vector<1x128xi32>
    %34 = arith.cmpi sge, %26, %33 : vector<1x128xi32>
    %35 = arith.extui %34 : vector<1x128xi1> to vector<1x128xi32>
    %36 = arith.sitofp %35 : vector<1x128xi32> to vector<1x128xf32>
    %37 = vector.shape_cast %36 : vector<1x128xf32> to vector<1x128xf32>
    %38 = vector.broadcast %37 : vector<1x128xf32> to vector<8x128xf32>
    %c3_i32 = arith.constant 3 : i32
    %39 = vector.broadcast %c3_i32 : i32 to vector<1x128xi32>
    %40 = arith.cmpi sge, %26, %39 : vector<1x128xi32>
    %41 = arith.extui %40 : vector<1x128xi1> to vector<1x128xi32>
    %42 = arith.sitofp %41 : vector<1x128xi32> to vector<1x128xf32>
    %43 = vector.shape_cast %42 : vector<1x128xf32> to vector<1x128xf32>
    %44 = vector.broadcast %43 : vector<1x128xf32> to vector<8x128xf32>
    %c10_i32 = arith.constant 10 : i32
    %45 = vector.broadcast %c10_i32 : i32 to vector<1x128xi32>
    %46 = arith.cmpi slt, %26, %45 : vector<1x128xi32>
    %47 = arith.extui %46 : vector<1x128xi1> to vector<1x128xi32>
    %48 = arith.sitofp %47 : vector<1x128xi32> to vector<1x128xf32>
    %49 = vector.shape_cast %48 : vector<1x128xf32> to vector<1x128xf32>
    %50 = vector.broadcast %49 : vector<1x128xf32> to vector<8x128xf32>
    %c9_i32 = arith.constant 9 : i32
    %51 = vector.broadcast %c9_i32 : i32 to vector<1x128xi32>
    %52 = arith.cmpi slt, %26, %51 : vector<1x128xi32>
    %53 = arith.extui %52 : vector<1x128xi1> to vector<1x128xi32>
    %54 = arith.sitofp %53 : vector<1x128xi32> to vector<1x128xf32>
    %55 = vector.shape_cast %54 : vector<1x128xf32> to vector<1x128xf32>
    %56 = vector.broadcast %55 : vector<1x128xf32> to vector<8x128xf32>
    %c8_i32 = arith.constant 8 : i32
    %57 = vector.broadcast %c8_i32 : i32 to vector<1x128xi32>
    %58 = arith.cmpi slt, %26, %57 : vector<1x128xi32>
    %59 = arith.extui %58 : vector<1x128xi1> to vector<1x128xi32>
    %60 = arith.sitofp %59 : vector<1x128xi32> to vector<1x128xf32>
    %61 = vector.shape_cast %60 : vector<1x128xf32> to vector<1x128xf32>
    %62 = vector.broadcast %61 : vector<1x128xf32> to vector<8x128xf32>
    %c0_i32_13 = arith.constant 0 : i32
    %63 = vector.broadcast %c0_i32_13 : i32 to vector<1x128xi32>
    %64 = arith.cmpi eq, %26, %63 : vector<1x128xi32>
    %65 = arith.extui %64 : vector<1x128xi1> to vector<1x128xi32>
    %66 = arith.sitofp %65 : vector<1x128xi32> to vector<1x128xf32>
    %67 = vector.shape_cast %66 : vector<1x128xf32> to vector<1x128xf32>
    %68 = vector.broadcast %67 : vector<1x128xf32> to vector<8x128xf32>
    %c0_i32_14 = arith.constant 0 : i32
    %69 = arith.index_cast %c0_i32_14 : i32 to index
    %c0_15 = arith.constant 0 : index
    %c0_16 = arith.constant 0 : index
    %70 = vector.load %arg9[%69, %c0_15, %c0_16] : memref<8x8x128xf32, #tpu.memory_space<vmem>>, vector<1x8x128xf32>
    %71 = vector.shape_cast %70 : vector<1x8x128xf32> to vector<8x128xf32>
    %72 = vector.shape_cast %68 : vector<8x128xf32> to vector<1x8x128xf32>
    tpu.vector_store %arg9[%69, %c0_15, %c0_16], %72 {strides = array<i32>} : memref<8x8x128xf32, #tpu.memory_space<vmem>>, vector<1x8x128xf32>,
    %73 = arith.index_cast %c0_i32_14 : i32 to index
    %c0_17 = arith.constant 0 : index
    %c0_18 = arith.constant 0 : index
    %74 = vector.load %arg4[%73, %c0_17, %c0_18] : memref<8x8x4xf32, #tpu.memory_space<vmem>>, vector<1x8x4xf32>
    %75 = vector.shape_cast %74 : vector<1x8x4xf32> to vector<8x4xf32>
    %76 = vector.extract_strided_slice %75 {offsets = [0, 0], sizes = [8, 1], strides = [1, 1]} : vector<8x4xf32> to vector<8x1xf32>
    %77 = vector.broadcast %76 : vector<8x1xf32> to vector<8x128xf32>
    %78 = arith.mulf %77, %68 : vector<8x128xf32>
    %79 = vector.extract_strided_slice %75 {offsets = [0, 1], sizes = [8, 1], strides = [1, 1]} : vector<8x4xf32> to vector<8x1xf32>
    %c1_i32_19 = arith.constant 1 : i32
    %80 = tpu.dynamic_rotate %68 by %c1_i32_19 dim 1 : vector<8x128xf32>, i32 -> vector<8x128xf32>
    %81 = arith.mulf %80, %32 : vector<8x128xf32>
    %82 = vector.broadcast %79 : vector<8x1xf32> to vector<8x128xf32>
    %83 = arith.mulf %82, %81 : vector<8x128xf32>
    %84 = arith.addf %78, %83 : vector<8x128xf32>
    %85 = vector.extract_strided_slice %75 {offsets = [0, 2], sizes = [8, 1], strides = [1, 1]} : vector<8x4xf32> to vector<8x1xf32>
    %c2_i32_20 = arith.constant 2 : i32
    %86 = tpu.dynamic_rotate %68 by %c2_i32_20 dim 1 : vector<8x128xf32>, i32 -> vector<8x128xf32>
    %87 = arith.mulf %86, %38 : vector<8x128xf32>
    %88 = vector.broadcast %85 : vector<8x1xf32> to vector<8x128xf32>
    %89 = arith.mulf %88, %87 : vector<8x128xf32>
    %90 = arith.addf %84, %89 : vector<8x128xf32>
    %91 = vector.extract_strided_slice %75 {offsets = [0, 3], sizes = [8, 1], strides = [1, 1]} : vector<8x4xf32> to vector<8x1xf32>
    %c3_i32_21 = arith.constant 3 : i32
    %92 = tpu.dynamic_rotate %68 by %c3_i32_21 dim 1 : vector<8x128xf32>, i32 -> vector<8x128xf32>
    %93 = arith.mulf %92, %44 : vector<8x128xf32>
    %94 = vector.broadcast %91 : vector<8x1xf32> to vector<8x128xf32>
    %95 = arith.mulf %94, %93 : vector<8x128xf32>
    %96 = arith.addf %90, %95 : vector<8x128xf32>
    %c1_i32_22 = arith.constant 1 : i32
    %97 = arith.index_cast %c1_i32_22 : i32 to index
    %c0_23 = arith.constant 0 : index
    %c0_24 = arith.constant 0 : index
    %98 = vector.load %arg9[%97, %c0_23, %c0_24] : memref<8x8x128xf32, #tpu.memory_space<vmem>>, vector<1x8x128xf32>
    %99 = vector.shape_cast %98 : vector<1x8x128xf32> to vector<8x128xf32>
    %100 = vector.shape_cast %96 : vector<8x128xf32> to vector<1x8x128xf32>
    tpu.vector_store %arg9[%97, %c0_23, %c0_24], %100 {strides = array<i32>} : memref<8x8x128xf32, #tpu.memory_space<vmem>>, vector<1x8x128xf32>,
    %101 = arith.index_cast %c1_i32_22 : i32 to index
    %c0_25 = arith.constant 0 : index
    %c0_26 = arith.constant 0 : index
    %102 = vector.load %arg4[%101, %c0_25, %c0_26] : memref<8x8x4xf32, #tpu.memory_space<vmem>>, vector<1x8x4xf32>
    %103 = vector.shape_cast %102 : vector<1x8x4xf32> to vector<8x4xf32>
    %104 = vector.extract_strided_slice %103 {offsets = [0, 0], sizes = [8, 1], strides = [1, 1]} : vector<8x4xf32> to vector<8x1xf32>
    %105 = vector.broadcast %104 : vector<8x1xf32> to vector<8x128xf32>
    %106 = arith.mulf %105, %96 : vector<8x128xf32>
    %107 = vector.extract_strided_slice %103 {offsets = [0, 1], sizes = [8, 1], strides = [1, 1]} : vector<8x4xf32> to vector<8x1xf32>
    %c1_i32_27 = arith.constant 1 : i32
    %108 = tpu.dynamic_rotate %96 by %c1_i32_27 dim 1 : vector<8x128xf32>, i32 -> vector<8x128xf32>
    %109 = arith.mulf %108, %32 : vector<8x128xf32>
    %110 = vector.broadcast %107 : vector<8x1xf32> to vector<8x128xf32>
    %111 = arith.mulf %110, %109 : vector<8x128xf32>
    %112 = arith.addf %106, %111 : vector<8x128xf32>
    %113 = vector.extract_strided_slice %103 {offsets = [0, 2], sizes = [8, 1], strides = [1, 1]} : vector<8x4xf32> to vector<8x1xf32>
    %c2_i32_28 = arith.constant 2 : i32
    %114 = tpu.dynamic_rotate %96 by %c2_i32_28 dim 1 : vector<8x128xf32>, i32 -> vector<8x128xf32>
    %115 = arith.mulf %114, %38 : vector<8x128xf32>
    %116 = vector.broadcast %113 : vector<8x1xf32> to vector<8x128xf32>
    %117 = arith.mulf %116, %115 : vector<8x128xf32>
    %118 = arith.addf %112, %117 : vector<8x128xf32>
    %119 = vector.extract_strided_slice %103 {offsets = [0, 3], sizes = [8, 1], strides = [1, 1]} : vector<8x4xf32> to vector<8x1xf32>
    %c3_i32_29 = arith.constant 3 : i32
    %120 = tpu.dynamic_rotate %96 by %c3_i32_29 dim 1 : vector<8x128xf32>, i32 -> vector<8x128xf32>
    %121 = arith.mulf %120, %44 : vector<8x128xf32>
    %122 = vector.broadcast %119 : vector<8x1xf32> to vector<8x128xf32>
    %123 = arith.mulf %122, %121 : vector<8x128xf32>
    %124 = arith.addf %118, %123 : vector<8x128xf32>
    %c2_i32_30 = arith.constant 2 : i32
    %125 = arith.index_cast %c2_i32_30 : i32 to index
    %c0_31 = arith.constant 0 : index
    %c0_32 = arith.constant 0 : index
    %126 = vector.load %arg9[%125, %c0_31, %c0_32] : memref<8x8x128xf32, #tpu.memory_space<vmem>>, vector<1x8x128xf32>
    %127 = vector.shape_cast %126 : vector<1x8x128xf32> to vector<8x128xf32>
    %128 = vector.shape_cast %124 : vector<8x128xf32> to vector<1x8x128xf32>
    tpu.vector_store %arg9[%125, %c0_31, %c0_32], %128 {strides = array<i32>} : memref<8x8x128xf32, #tpu.memory_space<vmem>>, vector<1x8x128xf32>,
    %129 = arith.index_cast %c2_i32_30 : i32 to index
    %c0_33 = arith.constant 0 : index
    %c0_34 = arith.constant 0 : index
    %130 = vector.load %arg4[%129, %c0_33, %c0_34] : memref<8x8x4xf32, #tpu.memory_space<vmem>>, vector<1x8x4xf32>
    %131 = vector.shape_cast %130 : vector<1x8x4xf32> to vector<8x4xf32>
    %132 = vector.extract_strided_slice %131 {offsets = [0, 0], sizes = [8, 1], strides = [1, 1]} : vector<8x4xf32> to vector<8x1xf32>
    %133 = vector.broadcast %132 : vector<8x1xf32> to vector<8x128xf32>
    %134 = arith.mulf %133, %124 : vector<8x128xf32>
    %135 = vector.extract_strided_slice %131 {offsets = [0, 1], sizes = [8, 1], strides = [1, 1]} : vector<8x4xf32> to vector<8x1xf32>
    %c1_i32_35 = arith.constant 1 : i32
    %136 = tpu.dynamic_rotate %124 by %c1_i32_35 dim 1 : vector<8x128xf32>, i32 -> vector<8x128xf32>
    %137 = arith.mulf %136, %32 : vector<8x128xf32>
    %138 = vector.broadcast %135 : vector<8x1xf32> to vector<8x128xf32>
    %139 = arith.mulf %138, %137 : vector<8x128xf32>
    %140 = arith.addf %134, %139 : vector<8x128xf32>
    %141 = vector.extract_strided_slice %131 {offsets = [0, 2], sizes = [8, 1], strides = [1, 1]} : vector<8x4xf32> to vector<8x1xf32>
    %c2_i32_36 = arith.constant 2 : i32
    %142 = tpu.dynamic_rotate %124 by %c2_i32_36 dim 1 : vector<8x128xf32>, i32 -> vector<8x128xf32>
    %143 = arith.mulf %142, %38 : vector<8x128xf32>
    %144 = vector.broadcast %141 : vector<8x1xf32> to vector<8x128xf32>
    %145 = arith.mulf %144, %143 : vector<8x128xf32>
    %146 = arith.addf %140, %145 : vector<8x128xf32>
    %147 = vector.extract_strided_slice %131 {offsets = [0, 3], sizes = [8, 1], strides = [1, 1]} : vector<8x4xf32> to vector<8x1xf32>
    %c3_i32_37 = arith.constant 3 : i32
    %148 = tpu.dynamic_rotate %124 by %c3_i32_37 dim 1 : vector<8x128xf32>, i32 -> vector<8x128xf32>
    %149 = arith.mulf %148, %44 : vector<8x128xf32>
    %150 = vector.broadcast %147 : vector<8x1xf32> to vector<8x128xf32>
    %151 = arith.mulf %150, %149 : vector<8x128xf32>
    %152 = arith.addf %146, %151 : vector<8x128xf32>
    %c3_i32_38 = arith.constant 3 : i32
    %153 = arith.index_cast %c3_i32_38 : i32 to index
    %c0_39 = arith.constant 0 : index
    %c0_40 = arith.constant 0 : index
    %154 = vector.load %arg9[%153, %c0_39, %c0_40] : memref<8x8x128xf32, #tpu.memory_space<vmem>>, vector<1x8x128xf32>
    %155 = vector.shape_cast %154 : vector<1x8x128xf32> to vector<8x128xf32>
    %156 = vector.shape_cast %152 : vector<8x128xf32> to vector<1x8x128xf32>
    tpu.vector_store %arg9[%153, %c0_39, %c0_40], %156 {strides = array<i32>} : memref<8x8x128xf32, #tpu.memory_space<vmem>>, vector<1x8x128xf32>,
    %157 = arith.index_cast %c3_i32_38 : i32 to index
    %c0_41 = arith.constant 0 : index
    %c0_42 = arith.constant 0 : index
    %158 = vector.load %arg4[%157, %c0_41, %c0_42] : memref<8x8x4xf32, #tpu.memory_space<vmem>>, vector<1x8x4xf32>
    %159 = vector.shape_cast %158 : vector<1x8x4xf32> to vector<8x4xf32>
    %160 = vector.extract_strided_slice %159 {offsets = [0, 0], sizes = [8, 1], strides = [1, 1]} : vector<8x4xf32> to vector<8x1xf32>
    %161 = vector.broadcast %160 : vector<8x1xf32> to vector<8x128xf32>
    %162 = arith.mulf %161, %152 : vector<8x128xf32>
    %163 = vector.extract_strided_slice %159 {offsets = [0, 1], sizes = [8, 1], strides = [1, 1]} : vector<8x4xf32> to vector<8x1xf32>
    %c1_i32_43 = arith.constant 1 : i32
    %164 = tpu.dynamic_rotate %152 by %c1_i32_43 dim 1 : vector<8x128xf32>, i32 -> vector<8x128xf32>
    %165 = arith.mulf %164, %32 : vector<8x128xf32>
    %166 = vector.broadcast %163 : vector<8x1xf32> to vector<8x128xf32>
    %167 = arith.mulf %166, %165 : vector<8x128xf32>
    %168 = arith.addf %162, %167 : vector<8x128xf32>
    %169 = vector.extract_strided_slice %159 {offsets = [0, 2], sizes = [8, 1], strides = [1, 1]} : vector<8x4xf32> to vector<8x1xf32>
    %c2_i32_44 = arith.constant 2 : i32
    %170 = tpu.dynamic_rotate %152 by %c2_i32_44 dim 1 : vector<8x128xf32>, i32 -> vector<8x128xf32>
    %171 = arith.mulf %170, %38 : vector<8x128xf32>
    %172 = vector.broadcast %169 : vector<8x1xf32> to vector<8x128xf32>
    %173 = arith.mulf %172, %171 : vector<8x128xf32>
    %174 = arith.addf %168, %173 : vector<8x128xf32>
    %175 = vector.extract_strided_slice %159 {offsets = [0, 3], sizes = [8, 1], strides = [1, 1]} : vector<8x4xf32> to vector<8x1xf32>
    %c3_i32_45 = arith.constant 3 : i32
    %176 = tpu.dynamic_rotate %152 by %c3_i32_45 dim 1 : vector<8x128xf32>, i32 -> vector<8x128xf32>
    %177 = arith.mulf %176, %44 : vector<8x128xf32>
    %178 = vector.broadcast %175 : vector<8x1xf32> to vector<8x128xf32>
    %179 = arith.mulf %178, %177 : vector<8x128xf32>
    %180 = arith.addf %174, %179 : vector<8x128xf32>
    %c4_i32 = arith.constant 4 : i32
    %181 = arith.index_cast %c4_i32 : i32 to index
    %c0_46 = arith.constant 0 : index
    %c0_47 = arith.constant 0 : index
    %182 = vector.load %arg9[%181, %c0_46, %c0_47] : memref<8x8x128xf32, #tpu.memory_space<vmem>>, vector<1x8x128xf32>
    %183 = vector.shape_cast %182 : vector<1x8x128xf32> to vector<8x128xf32>
    %184 = vector.shape_cast %180 : vector<8x128xf32> to vector<1x8x128xf32>
    tpu.vector_store %arg9[%181, %c0_46, %c0_47], %184 {strides = array<i32>} : memref<8x8x128xf32, #tpu.memory_space<vmem>>, vector<1x8x128xf32>,
    %185 = arith.index_cast %c4_i32 : i32 to index
    %c0_48 = arith.constant 0 : index
    %c0_49 = arith.constant 0 : index
    %186 = vector.load %arg4[%185, %c0_48, %c0_49] : memref<8x8x4xf32, #tpu.memory_space<vmem>>, vector<1x8x4xf32>
    %187 = vector.shape_cast %186 : vector<1x8x4xf32> to vector<8x4xf32>
    %188 = vector.extract_strided_slice %187 {offsets = [0, 0], sizes = [8, 1], strides = [1, 1]} : vector<8x4xf32> to vector<8x1xf32>
    %189 = vector.broadcast %188 : vector<8x1xf32> to vector<8x128xf32>
    %190 = arith.mulf %189, %180 : vector<8x128xf32>
    %191 = vector.extract_strided_slice %187 {offsets = [0, 1], sizes = [8, 1], strides = [1, 1]} : vector<8x4xf32> to vector<8x1xf32>
    %c1_i32_50 = arith.constant 1 : i32
    %192 = tpu.dynamic_rotate %180 by %c1_i32_50 dim 1 : vector<8x128xf32>, i32 -> vector<8x128xf32>
    %193 = arith.mulf %192, %32 : vector<8x128xf32>
    %194 = vector.broadcast %191 : vector<8x1xf32> to vector<8x128xf32>
    %195 = arith.mulf %194, %193 : vector<8x128xf32>
    %196 = arith.addf %190, %195 : vector<8x128xf32>
    %197 = vector.extract_strided_slice %187 {offsets = [0, 2], sizes = [8, 1], strides = [1, 1]} : vector<8x4xf32> to vector<8x1xf32>
    %c2_i32_51 = arith.constant 2 : i32
    %198 = tpu.dynamic_rotate %180 by %c2_i32_51 dim 1 : vector<8x128xf32>, i32 -> vector<8x128xf32>
    %199 = arith.mulf %198, %38 : vector<8x128xf32>
    %200 = vector.broadcast %197 : vector<8x1xf32> to vector<8x128xf32>
    %201 = arith.mulf %200, %199 : vector<8x128xf32>
    %202 = arith.addf %196, %201 : vector<8x128xf32>
    %203 = vector.extract_strided_slice %187 {offsets = [0, 3], sizes = [8, 1], strides = [1, 1]} : vector<8x4xf32> to vector<8x1xf32>
    %c3_i32_52 = arith.constant 3 : i32
    %204 = tpu.dynamic_rotate %180 by %c3_i32_52 dim 1 : vector<8x128xf32>, i32 -> vector<8x128xf32>
    %205 = arith.mulf %204, %44 : vector<8x128xf32>
    %206 = vector.broadcast %203 : vector<8x1xf32> to vector<8x128xf32>
    %207 = arith.mulf %206, %205 : vector<8x128xf32>
    %208 = arith.addf %202, %207 : vector<8x128xf32>
    %c5_i32 = arith.constant 5 : i32
    %209 = arith.index_cast %c5_i32 : i32 to index
    %c0_53 = arith.constant 0 : index
    %c0_54 = arith.constant 0 : index
    %210 = vector.load %arg9[%209, %c0_53, %c0_54] : memref<8x8x128xf32, #tpu.memory_space<vmem>>, vector<1x8x128xf32>
    %211 = vector.shape_cast %210 : vector<1x8x128xf32> to vector<8x128xf32>
    %212 = vector.shape_cast %208 : vector<8x128xf32> to vector<1x8x128xf32>
    tpu.vector_store %arg9[%209, %c0_53, %c0_54], %212 {strides = array<i32>} : memref<8x8x128xf32, #tpu.memory_space<vmem>>, vector<1x8x128xf32>,
    %213 = arith.index_cast %c5_i32 : i32 to index
    %c0_55 = arith.constant 0 : index
    %c0_56 = arith.constant 0 : index
    %214 = vector.load %arg4[%213, %c0_55, %c0_56] : memref<8x8x4xf32, #tpu.memory_space<vmem>>, vector<1x8x4xf32>
    %215 = vector.shape_cast %214 : vector<1x8x4xf32> to vector<8x4xf32>
    %216 = vector.extract_strided_slice %215 {offsets = [0, 0], sizes = [8, 1], strides = [1, 1]} : vector<8x4xf32> to vector<8x1xf32>
    %217 = vector.broadcast %216 : vector<8x1xf32> to vector<8x128xf32>
    %218 = arith.mulf %217, %208 : vector<8x128xf32>
    %219 = vector.extract_strided_slice %215 {offsets = [0, 1], sizes = [8, 1], strides = [1, 1]} : vector<8x4xf32> to vector<8x1xf32>
    %c1_i32_57 = arith.constant 1 : i32
    %220 = tpu.dynamic_rotate %208 by %c1_i32_57 dim 1 : vector<8x128xf32>, i32 -> vector<8x128xf32>
    %221 = arith.mulf %220, %32 : vector<8x128xf32>
    %222 = vector.broadcast %219 : vector<8x1xf32> to vector<8x128xf32>
    %223 = arith.mulf %222, %221 : vector<8x128xf32>
    %224 = arith.addf %218, %223 : vector<8x128xf32>
    %225 = vector.extract_strided_slice %215 {offsets = [0, 2], sizes = [8, 1], strides = [1, 1]} : vector<8x4xf32> to vector<8x1xf32>
    %c2_i32_58 = arith.constant 2 : i32
    %226 = tpu.dynamic_rotate %208 by %c2_i32_58 dim 1 : vector<8x128xf32>, i32 -> vector<8x128xf32>
    %227 = arith.mulf %226, %38 : vector<8x128xf32>
    %228 = vector.broadcast %225 : vector<8x1xf32> to vector<8x128xf32>
    %229 = arith.mulf %228, %227 : vector<8x128xf32>
    %230 = arith.addf %224, %229 : vector<8x128xf32>
    %231 = vector.extract_strided_slice %215 {offsets = [0, 3], sizes = [8, 1], strides = [1, 1]} : vector<8x4xf32> to vector<8x1xf32>
    %c3_i32_59 = arith.constant 3 : i32
    %232 = tpu.dynamic_rotate %208 by %c3_i32_59 dim 1 : vector<8x128xf32>, i32 -> vector<8x128xf32>
    %233 = arith.mulf %232, %44 : vector<8x128xf32>
    %234 = vector.broadcast %231 : vector<8x1xf32> to vector<8x128xf32>
    %235 = arith.mulf %234, %233 : vector<8x128xf32>
    %236 = arith.addf %230, %235 : vector<8x128xf32>
    %c6_i32 = arith.constant 6 : i32
    %237 = arith.index_cast %c6_i32 : i32 to index
    %c0_60 = arith.constant 0 : index
    %c0_61 = arith.constant 0 : index
    %238 = vector.load %arg9[%237, %c0_60, %c0_61] : memref<8x8x128xf32, #tpu.memory_space<vmem>>, vector<1x8x128xf32>
    %239 = vector.shape_cast %238 : vector<1x8x128xf32> to vector<8x128xf32>
    %240 = vector.shape_cast %236 : vector<8x128xf32> to vector<1x8x128xf32>
    tpu.vector_store %arg9[%237, %c0_60, %c0_61], %240 {strides = array<i32>} : memref<8x8x128xf32, #tpu.memory_space<vmem>>, vector<1x8x128xf32>,
    %241 = arith.index_cast %c6_i32 : i32 to index
    %c0_62 = arith.constant 0 : index
    %c0_63 = arith.constant 0 : index
    %242 = vector.load %arg4[%241, %c0_62, %c0_63] : memref<8x8x4xf32, #tpu.memory_space<vmem>>, vector<1x8x4xf32>
    %243 = vector.shape_cast %242 : vector<1x8x4xf32> to vector<8x4xf32>
    %244 = vector.extract_strided_slice %243 {offsets = [0, 0], sizes = [8, 1], strides = [1, 1]} : vector<8x4xf32> to vector<8x1xf32>
    %245 = vector.broadcast %244 : vector<8x1xf32> to vector<8x128xf32>
    %246 = arith.mulf %245, %236 : vector<8x128xf32>
    %247 = vector.extract_strided_slice %243 {offsets = [0, 1], sizes = [8, 1], strides = [1, 1]} : vector<8x4xf32> to vector<8x1xf32>
    %c1_i32_64 = arith.constant 1 : i32
    %248 = tpu.dynamic_rotate %236 by %c1_i32_64 dim 1 : vector<8x128xf32>, i32 -> vector<8x128xf32>
    %249 = arith.mulf %248, %32 : vector<8x128xf32>
    %250 = vector.broadcast %247 : vector<8x1xf32> to vector<8x128xf32>
    %251 = arith.mulf %250, %249 : vector<8x128xf32>
    %252 = arith.addf %246, %251 : vector<8x128xf32>
    %253 = vector.extract_strided_slice %243 {offsets = [0, 2], sizes = [8, 1], strides = [1, 1]} : vector<8x4xf32> to vector<8x1xf32>
    %c2_i32_65 = arith.constant 2 : i32
    %254 = tpu.dynamic_rotate %236 by %c2_i32_65 dim 1 : vector<8x128xf32>, i32 -> vector<8x128xf32>
    %255 = arith.mulf %254, %38 : vector<8x128xf32>
    %256 = vector.broadcast %253 : vector<8x1xf32> to vector<8x128xf32>
    %257 = arith.mulf %256, %255 : vector<8x128xf32>
    %258 = arith.addf %252, %257 : vector<8x128xf32>
    %259 = vector.extract_strided_slice %243 {offsets = [0, 3], sizes = [8, 1], strides = [1, 1]} : vector<8x4xf32> to vector<8x1xf32>
    %c3_i32_66 = arith.constant 3 : i32
    %260 = tpu.dynamic_rotate %236 by %c3_i32_66 dim 1 : vector<8x128xf32>, i32 -> vector<8x128xf32>
    %261 = arith.mulf %260, %44 : vector<8x128xf32>
    %262 = vector.broadcast %259 : vector<8x1xf32> to vector<8x128xf32>
    %263 = arith.mulf %262, %261 : vector<8x128xf32>
    %264 = arith.addf %258, %263 : vector<8x128xf32>
    %c7_i32 = arith.constant 7 : i32
    %265 = arith.index_cast %c7_i32 : i32 to index
    %c0_67 = arith.constant 0 : index
    %c0_68 = arith.constant 0 : index
    %266 = vector.load %arg9[%265, %c0_67, %c0_68] : memref<8x8x128xf32, #tpu.memory_space<vmem>>, vector<1x8x128xf32>
    %267 = vector.shape_cast %266 : vector<1x8x128xf32> to vector<8x128xf32>
    %268 = vector.shape_cast %264 : vector<8x128xf32> to vector<1x8x128xf32>
    tpu.vector_store %arg9[%265, %c0_67, %c0_68], %268 {strides = array<i32>} : memref<8x8x128xf32, #tpu.memory_space<vmem>>, vector<1x8x128xf32>,
    %269 = arith.index_cast %c7_i32 : i32 to index
    %c0_69 = arith.constant 0 : index
    %c0_70 = arith.constant 0 : index
    %270 = vector.load %arg4[%269, %c0_69, %c0_70] : memref<8x8x4xf32, #tpu.memory_space<vmem>>, vector<1x8x4xf32>
    %271 = vector.shape_cast %270 : vector<1x8x4xf32> to vector<8x4xf32>
    %272 = vector.extract_strided_slice %271 {offsets = [0, 0], sizes = [8, 1], strides = [1, 1]} : vector<8x4xf32> to vector<8x1xf32>
    %273 = vector.broadcast %272 : vector<8x1xf32> to vector<8x128xf32>
    %274 = arith.mulf %273, %264 : vector<8x128xf32>
    %275 = vector.extract_strided_slice %271 {offsets = [0, 1], sizes = [8, 1], strides = [1, 1]} : vector<8x4xf32> to vector<8x1xf32>
    %c1_i32_71 = arith.constant 1 : i32
    %276 = tpu.dynamic_rotate %264 by %c1_i32_71 dim 1 : vector<8x128xf32>, i32 -> vector<8x128xf32>
    %277 = arith.mulf %276, %32 : vector<8x128xf32>
    %278 = vector.broadcast %275 : vector<8x1xf32> to vector<8x128xf32>
    %279 = arith.mulf %278, %277 : vector<8x128xf32>
    %280 = arith.addf %274, %279 : vector<8x128xf32>
    %281 = vector.extract_strided_slice %271 {offsets = [0, 2], sizes = [8, 1], strides = [1, 1]} : vector<8x4xf32> to vector<8x1xf32>
    %c2_i32_72 = arith.constant 2 : i32
    %282 = tpu.dynamic_rotate %264 by %c2_i32_72 dim 1 : vector<8x128xf32>, i32 -> vector<8x128xf32>
    %283 = arith.mulf %282, %38 : vector<8x128xf32>
    %284 = vector.broadcast %281 : vector<8x1xf32> to vector<8x128xf32>
    %285 = arith.mulf %284, %283 : vector<8x128xf32>
    %286 = arith.addf %280, %285 : vector<8x128xf32>
    %287 = vector.extract_strided_slice %271 {offsets = [0, 3], sizes = [8, 1], strides = [1, 1]} : vector<8x4xf32> to vector<8x1xf32>
    %c3_i32_73 = arith.constant 3 : i32
    %288 = tpu.dynamic_rotate %264 by %c3_i32_73 dim 1 : vector<8x128xf32>, i32 -> vector<8x128xf32>
    %289 = arith.mulf %288, %44 : vector<8x128xf32>
    %290 = vector.broadcast %287 : vector<8x1xf32> to vector<8x128xf32>
    %291 = arith.mulf %290, %289 : vector<8x128xf32>
    %292 = arith.addf %286, %291 : vector<8x128xf32>
    %c8_i32_74 = arith.constant 8 : i32
    %c0_75 = arith.constant 0 : index
    %c0_76 = arith.constant 0 : index
    %293 = vector.load %arg3[%c0_75, %c0_76] : memref<8x10xf32, #tpu.memory_space<vmem>>, vector<8x10xf32>
    %cst_77 = arith.constant dense<0.000000e+00> : vector<8xf32>
    %294 = vector.multi_reduction <add>, %293, %cst_77 [1] : vector<8x10xf32> to vector<8xf32>
    %295 = vector.shape_cast %294 : vector<8xf32> to vector<8x1xf32>
    %296 = arith.fptosi %295 : vector<8x1xf32> to vector<8x1xi32>
    %297 = vector.broadcast %26 : vector<1x128xi32> to vector<8x128xi32>
    %298 = vector.broadcast %296 : vector<8x1xi32> to vector<8x128xi32>
    %299 = arith.cmpi eq, %297, %298 : vector<8x128xi32>
    %300 = arith.extui %299 : vector<8x128xi1> to vector<8x128xi32>
    %301 = arith.sitofp %300 : vector<8x128xi32> to vector<8x128xf32>
    %302 = arith.mulf %292, %301 : vector<8x128xf32>
    %cst_78 = arith.constant dense<0.000000e+00> : vector<8xf32>
    %303 = vector.multi_reduction <add>, %302, %cst_78 [1] : vector<8x128xf32> to vector<8xf32>
    %304 = vector.shape_cast %303 : vector<8xf32> to vector<8x1xf32>
    %305 = math.log %304 : vector<8x1xf32>
    %c0_79 = arith.constant 0 : index
    %c0_80 = arith.constant 0 : index
    %306 = vector.load %arg8[%c0_79, %c0_80] : memref<8x1xf32, #tpu.memory_space<vmem>>, vector<8x1xf32>
    tpu.vector_store %arg8[%c0_79, %c0_80], %305 {strides = array<i32>} : memref<8x1xf32, #tpu.memory_space<vmem>>, vector<8x1xf32>,
    %cst_81 = arith.constant 0.000000e+00 : f32
    %307 = vector.broadcast %cst_81 : f32 to vector<8x1xf32>
    %308 = arith.cmpf ogt, %304, %307 : vector<8x1xf32>
    %cst_82 = arith.constant 1.000000e+00 : f32
    %309 = vector.broadcast %cst_82 : f32 to vector<8x1xf32>
    %310 = arith.divf %309, %304 : vector<8x1xf32>
    %cst_83 = arith.constant 0.000000e+00 : f32
    %311 = vector.broadcast %cst_83 : f32 to vector<8x1xf32>
    %312 = arith.select %308, %310, %311 : vector<8x1xi1>, vector<8x1xf32>
    %313 = vector.broadcast %312 : vector<8x1xf32> to vector<8x128xf32>
    %314 = arith.mulf %301, %313 : vector<8x128xf32>
    %c0_i32_84 = arith.constant 0 : i32
    %c7_i32_85 = arith.constant 7 : i32
    %315 = arith.subi %c7_i32_85, %c0_i32_84 : i32
    %316 = arith.index_cast %315 : i32 to index
    %c0_86 = arith.constant 0 : index
    %c0_87 = arith.constant 0 : index
    %317 = vector.load %arg10[%316, %c0_86, %c0_87] : memref<8x8x128xf32, #tpu.memory_space<vmem>>, vector<1x8x128xf32>
    %318 = vector.shape_cast %317 : vector<1x8x128xf32> to vector<8x128xf32>
    %319 = vector.shape_cast %314 : vector<8x128xf32> to vector<1x8x128xf32>
    tpu.vector_store %arg10[%316, %c0_86, %c0_87], %319 {strides = array<i32>} : memref<8x8x128xf32, #tpu.memory_space<vmem>>, vector<1x8x128xf32>,
    %320 = arith.index_cast %315 : i32 to index
    %c0_88 = arith.constant 0 : index
    %c0_89 = arith.constant 0 : index
    %321 = vector.load %arg4[%320, %c0_88, %c0_89] : memref<8x8x4xf32, #tpu.memory_space<vmem>>, vector<1x8x4xf32>
    %322 = vector.shape_cast %321 : vector<1x8x4xf32> to vector<8x4xf32>
    %323 = vector.extract_strided_slice %322 {offsets = [0, 0], sizes = [8, 1], strides = [1, 1]} : vector<8x4xf32> to vector<8x1xf32>
    %324 = vector.broadcast %323 : vector<8x1xf32> to vector<8x128xf32>
    %325 = arith.mulf %324, %314 : vector<8x128xf32>
    %326 = vector.extract_strided_slice %322 {offsets = [0, 1], sizes = [8, 1], strides = [1, 1]} : vector<8x4xf32> to vector<8x1xf32>
    %c127_i32 = arith.constant 127 : i32
    %327 = tpu.dynamic_rotate %314 by %c127_i32 dim 1 : vector<8x128xf32>, i32 -> vector<8x128xf32>
    %328 = arith.mulf %327, %50 : vector<8x128xf32>
    %329 = vector.broadcast %326 : vector<8x1xf32> to vector<8x128xf32>
    %330 = arith.mulf %329, %328 : vector<8x128xf32>
    %331 = arith.addf %325, %330 : vector<8x128xf32>
    %332 = vector.extract_strided_slice %322 {offsets = [0, 2], sizes = [8, 1], strides = [1, 1]} : vector<8x4xf32> to vector<8x1xf32>
    %c126_i32 = arith.constant 126 : i32
    %333 = tpu.dynamic_rotate %314 by %c126_i32 dim 1 : vector<8x128xf32>, i32 -> vector<8x128xf32>
    %334 = arith.mulf %333, %56 : vector<8x128xf32>
    %335 = vector.broadcast %332 : vector<8x1xf32> to vector<8x128xf32>
    %336 = arith.mulf %335, %334 : vector<8x128xf32>
    %337 = arith.addf %331, %336 : vector<8x128xf32>
    %338 = vector.extract_strided_slice %322 {offsets = [0, 3], sizes = [8, 1], strides = [1, 1]} : vector<8x4xf32> to vector<8x1xf32>
    %c125_i32 = arith.constant 125 : i32
    %339 = tpu.dynamic_rotate %314 by %c125_i32 dim 1 : vector<8x128xf32>, i32 -> vector<8x128xf32>
    %340 = arith.mulf %339, %62 : vector<8x128xf32>
    %341 = vector.broadcast %338 : vector<8x1xf32> to vector<8x128xf32>
    %342 = arith.mulf %341, %340 : vector<8x128xf32>
    %343 = arith.addf %337, %342 : vector<8x128xf32>
    %c1_i32_90 = arith.constant 1 : i32
    %c7_i32_91 = arith.constant 7 : i32
    %344 = arith.subi %c7_i32_91, %c1_i32_90 : i32
    %345 = arith.index_cast %344 : i32 to index
    %c0_92 = arith.constant 0 : index
    %c0_93 = arith.constant 0 : index
    %346 = vector.load %arg10[%345, %c0_92, %c0_93] : memref<8x8x128xf32, #tpu.memory_space<vmem>>, vector<1x8x128xf32>
    %347 = vector.shape_cast %346 : vector<1x8x128xf32> to vector<8x128xf32>
    %348 = vector.shape_cast %343 : vector<8x128xf32> to vector<1x8x128xf32>
    tpu.vector_store %arg10[%345, %c0_92, %c0_93], %348 {strides = array<i32>} : memref<8x8x128xf32, #tpu.memory_space<vmem>>, vector<1x8x128xf32>,
    %349 = arith.index_cast %344 : i32 to index
    %c0_94 = arith.constant 0 : index
    %c0_95 = arith.constant 0 : index
    %350 = vector.load %arg4[%349, %c0_94, %c0_95] : memref<8x8x4xf32, #tpu.memory_space<vmem>>, vector<1x8x4xf32>
    %351 = vector.shape_cast %350 : vector<1x8x4xf32> to vector<8x4xf32>
    %352 = vector.extract_strided_slice %351 {offsets = [0, 0], sizes = [8, 1], strides = [1, 1]} : vector<8x4xf32> to vector<8x1xf32>
    %353 = vector.broadcast %352 : vector<8x1xf32> to vector<8x128xf32>
    %354 = arith.mulf %353, %343 : vector<8x128xf32>
    %355 = vector.extract_strided_slice %351 {offsets = [0, 1], sizes = [8, 1], strides = [1, 1]} : vector<8x4xf32> to vector<8x1xf32>
    %c127_i32_96 = arith.constant 127 : i32
    %356 = tpu.dynamic_rotate %343 by %c127_i32_96 dim 1 : vector<8x128xf32>, i32 -> vector<8x128xf32>
    %357 = arith.mulf %356, %50 : vector<8x128xf32>
    %358 = vector.broadcast %355 : vector<8x1xf32> to vector<8x128xf32>
    %359 = arith.mulf %358, %357 : vector<8x128xf32>
    %360 = arith.addf %354, %359 : vector<8x128xf32>
    %361 = vector.extract_strided_slice %351 {offsets = [0, 2], sizes = [8, 1], strides = [1, 1]} : vector<8x4xf32> to vector<8x1xf32>
    %c126_i32_97 = arith.constant 126 : i32
    %362 = tpu.dynamic_rotate %343 by %c126_i32_97 dim 1 : vector<8x128xf32>, i32 -> vector<8x128xf32>
    %363 = arith.mulf %362, %56 : vector<8x128xf32>
    %364 = vector.broadcast %361 : vector<8x1xf32> to vector<8x128xf32>
    %365 = arith.mulf %364, %363 : vector<8x128xf32>
    %366 = arith.addf %360, %365 : vector<8x128xf32>
    %367 = vector.extract_strided_slice %351 {offsets = [0, 3], sizes = [8, 1], strides = [1, 1]} : vector<8x4xf32> to vector<8x1xf32>
    %c125_i32_98 = arith.constant 125 : i32
    %368 = tpu.dynamic_rotate %343 by %c125_i32_98 dim 1 : vector<8x128xf32>, i32 -> vector<8x128xf32>
    %369 = arith.mulf %368, %62 : vector<8x128xf32>
    %370 = vector.broadcast %367 : vector<8x1xf32> to vector<8x128xf32>
    %371 = arith.mulf %370, %369 : vector<8x128xf32>
    %372 = arith.addf %366, %371 : vector<8x128xf32>
    %c2_i32_99 = arith.constant 2 : i32
    %c7_i32_100 = arith.constant 7 : i32
    %373 = arith.subi %c7_i32_100, %c2_i32_99 : i32
    %374 = arith.index_cast %373 : i32 to index
    %c0_101 = arith.constant 0 : index
    %c0_102 = arith.constant 0 : index
    %375 = vector.load %arg10[%374, %c0_101, %c0_102] : memref<8x8x128xf32, #tpu.memory_space<vmem>>, vector<1x8x128xf32>
    %376 = vector.shape_cast %375 : vector<1x8x128xf32> to vector<8x128xf32>
    %377 = vector.shape_cast %372 : vector<8x128xf32> to vector<1x8x128xf32>
    tpu.vector_store %arg10[%374, %c0_101, %c0_102], %377 {strides = array<i32>} : memref<8x8x128xf32, #tpu.memory_space<vmem>>, vector<1x8x128xf32>,
    %378 = arith.index_cast %373 : i32 to index
    %c0_103 = arith.constant 0 : index
    %c0_104 = arith.constant 0 : index
    %379 = vector.load %arg4[%378, %c0_103, %c0_104] : memref<8x8x4xf32, #tpu.memory_space<vmem>>, vector<1x8x4xf32>
    %380 = vector.shape_cast %379 : vector<1x8x4xf32> to vector<8x4xf32>
    %381 = vector.extract_strided_slice %380 {offsets = [0, 0], sizes = [8, 1], strides = [1, 1]} : vector<8x4xf32> to vector<8x1xf32>
    %382 = vector.broadcast %381 : vector<8x1xf32> to vector<8x128xf32>
    %383 = arith.mulf %382, %372 : vector<8x128xf32>
    %384 = vector.extract_strided_slice %380 {offsets = [0, 1], sizes = [8, 1], strides = [1, 1]} : vector<8x4xf32> to vector<8x1xf32>
    %c127_i32_105 = arith.constant 127 : i32
    %385 = tpu.dynamic_rotate %372 by %c127_i32_105 dim 1 : vector<8x128xf32>, i32 -> vector<8x128xf32>
    %386 = arith.mulf %385, %50 : vector<8x128xf32>
    %387 = vector.broadcast %384 : vector<8x1xf32> to vector<8x128xf32>
    %388 = arith.mulf %387, %386 : vector<8x128xf32>
    %389 = arith.addf %383, %388 : vector<8x128xf32>
    %390 = vector.extract_strided_slice %380 {offsets = [0, 2], sizes = [8, 1], strides = [1, 1]} : vector<8x4xf32> to vector<8x1xf32>
    %c126_i32_106 = arith.constant 126 : i32
    %391 = tpu.dynamic_rotate %372 by %c126_i32_106 dim 1 : vector<8x128xf32>, i32 -> vector<8x128xf32>
    %392 = arith.mulf %391, %56 : vector<8x128xf32>
    %393 = vector.broadcast %390 : vector<8x1xf32> to vector<8x128xf32>
    %394 = arith.mulf %393, %392 : vector<8x128xf32>
    %395 = arith.addf %389, %394 : vector<8x128xf32>
    %396 = vector.extract_strided_slice %380 {offsets = [0, 3], sizes = [8, 1], strides = [1, 1]} : vector<8x4xf32> to vector<8x1xf32>
    %c125_i32_107 = arith.constant 125 : i32
    %397 = tpu.dynamic_rotate %372 by %c125_i32_107 dim 1 : vector<8x128xf32>, i32 -> vector<8x128xf32>
    %398 = arith.mulf %397, %62 : vector<8x128xf32>
    %399 = vector.broadcast %396 : vector<8x1xf32> to vector<8x128xf32>
    %400 = arith.mulf %399, %398 : vector<8x128xf32>
    %401 = arith.addf %395, %400 : vector<8x128xf32>
    %c3_i32_108 = arith.constant 3 : i32
    %c7_i32_109 = arith.constant 7 : i32
    %402 = arith.subi %c7_i32_109, %c3_i32_108 : i32
    %403 = arith.index_cast %402 : i32 to index
    %c0_110 = arith.constant 0 : index
    %c0_111 = arith.constant 0 : index
    %404 = vector.load %arg10[%403, %c0_110, %c0_111] : memref<8x8x128xf32, #tpu.memory_space<vmem>>, vector<1x8x128xf32>
    %405 = vector.shape_cast %404 : vector<1x8x128xf32> to vector<8x128xf32>
    %406 = vector.shape_cast %401 : vector<8x128xf32> to vector<1x8x128xf32>
    tpu.vector_store %arg10[%403, %c0_110, %c0_111], %406 {strides = array<i32>} : memref<8x8x128xf32, #tpu.memory_space<vmem>>, vector<1x8x128xf32>,
    %407 = arith.index_cast %402 : i32 to index
    %c0_112 = arith.constant 0 : index
    %c0_113 = arith.constant 0 : index
    %408 = vector.load %arg4[%407, %c0_112, %c0_113] : memref<8x8x4xf32, #tpu.memory_space<vmem>>, vector<1x8x4xf32>
    %409 = vector.shape_cast %408 : vector<1x8x4xf32> to vector<8x4xf32>
    %410 = vector.extract_strided_slice %409 {offsets = [0, 0], sizes = [8, 1], strides = [1, 1]} : vector<8x4xf32> to vector<8x1xf32>
    %411 = vector.broadcast %410 : vector<8x1xf32> to vector<8x128xf32>
    %412 = arith.mulf %411, %401 : vector<8x128xf32>
    %413 = vector.extract_strided_slice %409 {offsets = [0, 1], sizes = [8, 1], strides = [1, 1]} : vector<8x4xf32> to vector<8x1xf32>
    %c127_i32_114 = arith.constant 127 : i32
    %414 = tpu.dynamic_rotate %401 by %c127_i32_114 dim 1 : vector<8x128xf32>, i32 -> vector<8x128xf32>
    %415 = arith.mulf %414, %50 : vector<8x128xf32>
    %416 = vector.broadcast %413 : vector<8x1xf32> to vector<8x128xf32>
    %417 = arith.mulf %416, %415 : vector<8x128xf32>
    %418 = arith.addf %412, %417 : vector<8x128xf32>
    %419 = vector.extract_strided_slice %409 {offsets = [0, 2], sizes = [8, 1], strides = [1, 1]} : vector<8x4xf32> to vector<8x1xf32>
    %c126_i32_115 = arith.constant 126 : i32
    %420 = tpu.dynamic_rotate %401 by %c126_i32_115 dim 1 : vector<8x128xf32>, i32 -> vector<8x128xf32>
    %421 = arith.mulf %420, %56 : vector<8x128xf32>
    %422 = vector.broadcast %419 : vector<8x1xf32> to vector<8x128xf32>
    %423 = arith.mulf %422, %421 : vector<8x128xf32>
    %424 = arith.addf %418, %423 : vector<8x128xf32>
    %425 = vector.extract_strided_slice %409 {offsets = [0, 3], sizes = [8, 1], strides = [1, 1]} : vector<8x4xf32> to vector<8x1xf32>
    %c125_i32_116 = arith.constant 125 : i32
    %426 = tpu.dynamic_rotate %401 by %c125_i32_116 dim 1 : vector<8x128xf32>, i32 -> vector<8x128xf32>
    %427 = arith.mulf %426, %62 : vector<8x128xf32>
    %428 = vector.broadcast %425 : vector<8x1xf32> to vector<8x128xf32>
    %429 = arith.mulf %428, %427 : vector<8x128xf32>
    %430 = arith.addf %424, %429 : vector<8x128xf32>
    %c4_i32_117 = arith.constant 4 : i32
    %c7_i32_118 = arith.constant 7 : i32
    %431 = arith.subi %c7_i32_118, %c4_i32_117 : i32
    %432 = arith.index_cast %431 : i32 to index
    %c0_119 = arith.constant 0 : index
    %c0_120 = arith.constant 0 : index
    %433 = vector.load %arg10[%432, %c0_119, %c0_120] : memref<8x8x128xf32, #tpu.memory_space<vmem>>, vector<1x8x128xf32>
    %434 = vector.shape_cast %433 : vector<1x8x128xf32> to vector<8x128xf32>
    %435 = vector.shape_cast %430 : vector<8x128xf32> to vector<1x8x128xf32>
    tpu.vector_store %arg10[%432, %c0_119, %c0_120], %435 {strides = array<i32>} : memref<8x8x128xf32, #tpu.memory_space<vmem>>, vector<1x8x128xf32>,
    %436 = arith.index_cast %431 : i32 to index
    %c0_121 = arith.constant 0 : index
    %c0_122 = arith.constant 0 : index
    %437 = vector.load %arg4[%436, %c0_121, %c0_122] : memref<8x8x4xf32, #tpu.memory_space<vmem>>, vector<1x8x4xf32>
    %438 = vector.shape_cast %437 : vector<1x8x4xf32> to vector<8x4xf32>
    %439 = vector.extract_strided_slice %438 {offsets = [0, 0], sizes = [8, 1], strides = [1, 1]} : vector<8x4xf32> to vector<8x1xf32>
    %440 = vector.broadcast %439 : vector<8x1xf32> to vector<8x128xf32>
    %441 = arith.mulf %440, %430 : vector<8x128xf32>
    %442 = vector.extract_strided_slice %438 {offsets = [0, 1], sizes = [8, 1], strides = [1, 1]} : vector<8x4xf32> to vector<8x1xf32>
    %c127_i32_123 = arith.constant 127 : i32
    %443 = tpu.dynamic_rotate %430 by %c127_i32_123 dim 1 : vector<8x128xf32>, i32 -> vector<8x128xf32>
    %444 = arith.mulf %443, %50 : vector<8x128xf32>
    %445 = vector.broadcast %442 : vector<8x1xf32> to vector<8x128xf32>
    %446 = arith.mulf %445, %444 : vector<8x128xf32>
    %447 = arith.addf %441, %446 : vector<8x128xf32>
    %448 = vector.extract_strided_slice %438 {offsets = [0, 2], sizes = [8, 1], strides = [1, 1]} : vector<8x4xf32> to vector<8x1xf32>
    %c126_i32_124 = arith.constant 126 : i32
    %449 = tpu.dynamic_rotate %430 by %c126_i32_124 dim 1 : vector<8x128xf32>, i32 -> vector<8x128xf32>
    %450 = arith.mulf %449, %56 : vector<8x128xf32>
    %451 = vector.broadcast %448 : vector<8x1xf32> to vector<8x128xf32>
    %452 = arith.mulf %451, %450 : vector<8x128xf32>
    %453 = arith.addf %447, %452 : vector<8x128xf32>
    %454 = vector.extract_strided_slice %438 {offsets = [0, 3], sizes = [8, 1], strides = [1, 1]} : vector<8x4xf32> to vector<8x1xf32>
    %c125_i32_125 = arith.constant 125 : i32
    %455 = tpu.dynamic_rotate %430 by %c125_i32_125 dim 1 : vector<8x128xf32>, i32 -> vector<8x128xf32>
    %456 = arith.mulf %455, %62 : vector<8x128xf32>
    %457 = vector.broadcast %454 : vector<8x1xf32> to vector<8x128xf32>
    %458 = arith.mulf %457, %456 : vector<8x128xf32>
    %459 = arith.addf %453, %458 : vector<8x128xf32>
    %c5_i32_126 = arith.constant 5 : i32
    %c7_i32_127 = arith.constant 7 : i32
    %460 = arith.subi %c7_i32_127, %c5_i32_126 : i32
    %461 = arith.index_cast %460 : i32 to index
    %c0_128 = arith.constant 0 : index
    %c0_129 = arith.constant 0 : index
    %462 = vector.load %arg10[%461, %c0_128, %c0_129] : memref<8x8x128xf32, #tpu.memory_space<vmem>>, vector<1x8x128xf32>
    %463 = vector.shape_cast %462 : vector<1x8x128xf32> to vector<8x128xf32>
    %464 = vector.shape_cast %459 : vector<8x128xf32> to vector<1x8x128xf32>
    tpu.vector_store %arg10[%461, %c0_128, %c0_129], %464 {strides = array<i32>} : memref<8x8x128xf32, #tpu.memory_space<vmem>>, vector<1x8x128xf32>,
    %465 = arith.index_cast %460 : i32 to index
    %c0_130 = arith.constant 0 : index
    %c0_131 = arith.constant 0 : index
    %466 = vector.load %arg4[%465, %c0_130, %c0_131] : memref<8x8x4xf32, #tpu.memory_space<vmem>>, vector<1x8x4xf32>
    %467 = vector.shape_cast %466 : vector<1x8x4xf32> to vector<8x4xf32>
    %468 = vector.extract_strided_slice %467 {offsets = [0, 0], sizes = [8, 1], strides = [1, 1]} : vector<8x4xf32> to vector<8x1xf32>
    %469 = vector.broadcast %468 : vector<8x1xf32> to vector<8x128xf32>
    %470 = arith.mulf %469, %459 : vector<8x128xf32>
    %471 = vector.extract_strided_slice %467 {offsets = [0, 1], sizes = [8, 1], strides = [1, 1]} : vector<8x4xf32> to vector<8x1xf32>
    %c127_i32_132 = arith.constant 127 : i32
    %472 = tpu.dynamic_rotate %459 by %c127_i32_132 dim 1 : vector<8x128xf32>, i32 -> vector<8x128xf32>
    %473 = arith.mulf %472, %50 : vector<8x128xf32>
    %474 = vector.broadcast %471 : vector<8x1xf32> to vector<8x128xf32>
    %475 = arith.mulf %474, %473 : vector<8x128xf32>
    %476 = arith.addf %470, %475 : vector<8x128xf32>
    %477 = vector.extract_strided_slice %467 {offsets = [0, 2], sizes = [8, 1], strides = [1, 1]} : vector<8x4xf32> to vector<8x1xf32>
    %c126_i32_133 = arith.constant 126 : i32
    %478 = tpu.dynamic_rotate %459 by %c126_i32_133 dim 1 : vector<8x128xf32>, i32 -> vector<8x128xf32>
    %479 = arith.mulf %478, %56 : vector<8x128xf32>
    %480 = vector.broadcast %477 : vector<8x1xf32> to vector<8x128xf32>
    %481 = arith.mulf %480, %479 : vector<8x128xf32>
    %482 = arith.addf %476, %481 : vector<8x128xf32>
    %483 = vector.extract_strided_slice %467 {offsets = [0, 3], sizes = [8, 1], strides = [1, 1]} : vector<8x4xf32> to vector<8x1xf32>
    %c125_i32_134 = arith.constant 125 : i32
    %484 = tpu.dynamic_rotate %459 by %c125_i32_134 dim 1 : vector<8x128xf32>, i32 -> vector<8x128xf32>
    %485 = arith.mulf %484, %62 : vector<8x128xf32>
    %486 = vector.broadcast %483 : vector<8x1xf32> to vector<8x128xf32>
    %487 = arith.mulf %486, %485 : vector<8x128xf32>
    %488 = arith.addf %482, %487 : vector<8x128xf32>
    %c6_i32_135 = arith.constant 6 : i32
    %c7_i32_136 = arith.constant 7 : i32
    %489 = arith.subi %c7_i32_136, %c6_i32_135 : i32
    %490 = arith.index_cast %489 : i32 to index
    %c0_137 = arith.constant 0 : index
    %c0_138 = arith.constant 0 : index
    %491 = vector.load %arg10[%490, %c0_137, %c0_138] : memref<8x8x128xf32, #tpu.memory_space<vmem>>, vector<1x8x128xf32>
    %492 = vector.shape_cast %491 : vector<1x8x128xf32> to vector<8x128xf32>
    %493 = vector.shape_cast %488 : vector<8x128xf32> to vector<1x8x128xf32>
    tpu.vector_store %arg10[%490, %c0_137, %c0_138], %493 {strides = array<i32>} : memref<8x8x128xf32, #tpu.memory_space<vmem>>, vector<1x8x128xf32>,
    %494 = arith.index_cast %489 : i32 to index
    %c0_139 = arith.constant 0 : index
    %c0_140 = arith.constant 0 : index
    %495 = vector.load %arg4[%494, %c0_139, %c0_140] : memref<8x8x4xf32, #tpu.memory_space<vmem>>, vector<1x8x4xf32>
    %496 = vector.shape_cast %495 : vector<1x8x4xf32> to vector<8x4xf32>
    %497 = vector.extract_strided_slice %496 {offsets = [0, 0], sizes = [8, 1], strides = [1, 1]} : vector<8x4xf32> to vector<8x1xf32>
    %498 = vector.broadcast %497 : vector<8x1xf32> to vector<8x128xf32>
    %499 = arith.mulf %498, %488 : vector<8x128xf32>
    %500 = vector.extract_strided_slice %496 {offsets = [0, 1], sizes = [8, 1], strides = [1, 1]} : vector<8x4xf32> to vector<8x1xf32>
    %c127_i32_141 = arith.constant 127 : i32
    %501 = tpu.dynamic_rotate %488 by %c127_i32_141 dim 1 : vector<8x128xf32>, i32 -> vector<8x128xf32>
    %502 = arith.mulf %501, %50 : vector<8x128xf32>
    %503 = vector.broadcast %500 : vector<8x1xf32> to vector<8x128xf32>
    %504 = arith.mulf %503, %502 : vector<8x128xf32>
    %505 = arith.addf %499, %504 : vector<8x128xf32>
    %506 = vector.extract_strided_slice %496 {offsets = [0, 2], sizes = [8, 1], strides = [1, 1]} : vector<8x4xf32> to vector<8x1xf32>
    %c126_i32_142 = arith.constant 126 : i32
    %507 = tpu.dynamic_rotate %488 by %c126_i32_142 dim 1 : vector<8x128xf32>, i32 -> vector<8x128xf32>
    %508 = arith.mulf %507, %56 : vector<8x128xf32>
    %509 = vector.broadcast %506 : vector<8x1xf32> to vector<8x128xf32>
    %510 = arith.mulf %509, %508 : vector<8x128xf32>
    %511 = arith.addf %505, %510 : vector<8x128xf32>
    %512 = vector.extract_strided_slice %496 {offsets = [0, 3], sizes = [8, 1], strides = [1, 1]} : vector<8x4xf32> to vector<8x1xf32>
    %c125_i32_143 = arith.constant 125 : i32
    %513 = tpu.dynamic_rotate %488 by %c125_i32_143 dim 1 : vector<8x128xf32>, i32 -> vector<8x128xf32>
    %514 = arith.mulf %513, %62 : vector<8x128xf32>
    %515 = vector.broadcast %512 : vector<8x1xf32> to vector<8x128xf32>
    %516 = arith.mulf %515, %514 : vector<8x128xf32>
    %517 = arith.addf %511, %516 : vector<8x128xf32>
    %c7_i32_144 = arith.constant 7 : i32
    %c7_i32_145 = arith.constant 7 : i32
    %518 = arith.subi %c7_i32_145, %c7_i32_144 : i32
    %519 = arith.index_cast %518 : i32 to index
    %c0_146 = arith.constant 0 : index
    %c0_147 = arith.constant 0 : index
    %520 = vector.load %arg10[%519, %c0_146, %c0_147] : memref<8x8x128xf32, #tpu.memory_space<vmem>>, vector<1x8x128xf32>
    %521 = vector.shape_cast %520 : vector<1x8x128xf32> to vector<8x128xf32>
    %522 = vector.shape_cast %517 : vector<8x128xf32> to vector<1x8x128xf32>
    tpu.vector_store %arg10[%519, %c0_146, %c0_147], %522 {strides = array<i32>} : memref<8x8x128xf32, #tpu.memory_space<vmem>>, vector<1x8x128xf32>,
    %523 = arith.index_cast %518 : i32 to index
    %c0_148 = arith.constant 0 : index
    %c0_149 = arith.constant 0 : index
    %524 = vector.load %arg4[%523, %c0_148, %c0_149] : memref<8x8x4xf32, #tpu.memory_space<vmem>>, vector<1x8x4xf32>
    %525 = vector.shape_cast %524 : vector<1x8x4xf32> to vector<8x4xf32>
    %526 = vector.extract_strided_slice %525 {offsets = [0, 0], sizes = [8, 1], strides = [1, 1]} : vector<8x4xf32> to vector<8x1xf32>
    %527 = vector.broadcast %526 : vector<8x1xf32> to vector<8x128xf32>
    %528 = arith.mulf %527, %517 : vector<8x128xf32>
    %529 = vector.extract_strided_slice %525 {offsets = [0, 1], sizes = [8, 1], strides = [1, 1]} : vector<8x4xf32> to vector<8x1xf32>
    %c127_i32_150 = arith.constant 127 : i32
    %530 = tpu.dynamic_rotate %517 by %c127_i32_150 dim 1 : vector<8x128xf32>, i32 -> vector<8x128xf32>
    %531 = arith.mulf %530, %50 : vector<8x128xf32>
    %532 = vector.broadcast %529 : vector<8x1xf32> to vector<8x128xf32>
    %533 = arith.mulf %532, %531 : vector<8x128xf32>
    %534 = arith.addf %528, %533 : vector<8x128xf32>
    %535 = vector.extract_strided_slice %525 {offsets = [0, 2], sizes = [8, 1], strides = [1, 1]} : vector<8x4xf32> to vector<8x1xf32>
    %c126_i32_151 = arith.constant 126 : i32
    %536 = tpu.dynamic_rotate %517 by %c126_i32_151 dim 1 : vector<8x128xf32>, i32 -> vector<8x128xf32>
    %537 = arith.mulf %536, %56 : vector<8x128xf32>
    %538 = vector.broadcast %535 : vector<8x1xf32> to vector<8x128xf32>
    %539 = arith.mulf %538, %537 : vector<8x128xf32>
    %540 = arith.addf %534, %539 : vector<8x128xf32>
    %541 = vector.extract_strided_slice %525 {offsets = [0, 3], sizes = [8, 1], strides = [1, 1]} : vector<8x4xf32> to vector<8x1xf32>
    %c125_i32_152 = arith.constant 125 : i32
    %542 = tpu.dynamic_rotate %517 by %c125_i32_152 dim 1 : vector<8x128xf32>, i32 -> vector<8x128xf32>
    %543 = arith.mulf %542, %62 : vector<8x128xf32>
    %544 = vector.broadcast %541 : vector<8x1xf32> to vector<8x128xf32>
    %545 = arith.mulf %544, %543 : vector<8x128xf32>
    %546 = arith.addf %540, %545 : vector<8x128xf32>
    %c8_i32_153 = arith.constant 8 : i32
    %547 = tpu.iota {dimensions = array<i32: 2>} : vector<1x1x128xi32>
    %cst_154 = arith.constant 0.000000e+00 : f32
    %548 = vector.broadcast %cst_154 : f32 to vector<8x128xf32>
    %cst_155 = arith.constant 0.000000e+00 : f32
    %549 = vector.broadcast %cst_155 : f32 to vector<8x128xf32>
    %cst_156 = arith.constant 0.000000e+00 : f32
    %550 = vector.broadcast %cst_156 : f32 to vector<8x128xf32>
    %cst_157 = arith.constant 0.000000e+00 : f32
    %551 = vector.broadcast %cst_157 : f32 to vector<8x128xf32>
    %c1_i32_158 = arith.constant 1 : i32
    %552 = vector.broadcast %c1_i32_158 : i32 to vector<1x1x128xi32>
    %553 = arith.cmpi sge, %547, %552 : vector<1x1x128xi32>
    %554 = arith.extui %553 : vector<1x1x128xi1> to vector<1x1x128xi32>
    %555 = arith.sitofp %554 : vector<1x1x128xi32> to vector<1x1x128xf32>
    %556 = vector.shape_cast %555 : vector<1x1x128xf32> to vector<1x1x128xf32>
    %557 = vector.broadcast %556 : vector<1x1x128xf32> to vector<8x8x128xf32>
    %c2_i32_159 = arith.constant 2 : i32
    %558 = vector.broadcast %c2_i32_159 : i32 to vector<1x1x128xi32>
    %559 = arith.cmpi sge, %547, %558 : vector<1x1x128xi32>
    %560 = arith.extui %559 : vector<1x1x128xi1> to vector<1x1x128xi32>
    %561 = arith.sitofp %560 : vector<1x1x128xi32> to vector<1x1x128xf32>
    %562 = vector.shape_cast %561 : vector<1x1x128xf32> to vector<1x1x128xf32>
    %563 = vector.broadcast %562 : vector<1x1x128xf32> to vector<8x8x128xf32>
    %c3_i32_160 = arith.constant 3 : i32
    %564 = vector.broadcast %c3_i32_160 : i32 to vector<1x1x128xi32>
    %565 = arith.cmpi sge, %547, %564 : vector<1x1x128xi32>
    %566 = arith.extui %565 : vector<1x1x128xi1> to vector<1x1x128xi32>
    %567 = arith.sitofp %566 : vector<1x1x128xi32> to vector<1x1x128xf32>
    %568 = vector.shape_cast %567 : vector<1x1x128xf32> to vector<1x1x128xf32>
    %569 = vector.broadcast %568 : vector<1x1x128xf32> to vector<8x8x128xf32>
    %c10_i32_161 = arith.constant 10 : i32
    %570 = vector.broadcast %c10_i32_161 : i32 to vector<1x1x128xi32>
    %571 = arith.cmpi slt, %547, %570 : vector<1x1x128xi32>
    %572 = arith.extui %571 : vector<1x1x128xi1> to vector<1x1x128xi32>
    %573 = arith.sitofp %572 : vector<1x1x128xi32> to vector<1x1x128xf32>
    %574 = vector.shape_cast %573 : vector<1x1x128xf32> to vector<1x1x128xf32>
    %575 = vector.broadcast %574 : vector<1x1x128xf32> to vector<8x8x128xf32>
    %c0_162 = arith.constant 0 : index
    %c0_163 = arith.constant 0 : index
    %c0_164 = arith.constant 0 : index
    %576 = vector.load %arg9[%c0_162, %c0_163, %c0_164] : memref<8x8x128xf32, #tpu.memory_space<vmem>>, vector<8x8x128xf32>
    %c0_165 = arith.constant 0 : index
    %c0_166 = arith.constant 0 : index
    %c0_167 = arith.constant 0 : index
    %577 = vector.load %arg10[%c0_165, %c0_166, %c0_167] : memref<8x8x128xf32, #tpu.memory_space<vmem>>, vector<8x8x128xf32>
    %c0_168 = arith.constant 0 : index
    %c0_169 = arith.constant 0 : index
    %c0_170 = arith.constant 0 : index
    %578 = vector.load %arg4[%c0_168, %c0_169, %c0_170] : memref<8x8x4xf32, #tpu.memory_space<vmem>>, vector<8x8x4xf32>
    %cst_171 = arith.constant 0.000000e+00 : f32
    %579 = vector.broadcast %cst_171 : f32 to vector<8x8x128xf32>
    %cst_172 = arith.constant 0.000000e+00 : f32
    %580 = vector.broadcast %cst_172 : f32 to vector<8x8x128xf32>
    %c3_i32_173 = arith.constant 3 : i32
    %581 = tpu.dynamic_rotate %576 by %c3_i32_173 dim 2 : vector<8x8x128xf32>, i32 -> vector<8x8x128xf32>
    %582 = arith.mulf %581, %569 : vector<8x8x128xf32>
    %583 = arith.mulf %582, %580 : vector<8x8x128xf32>
    %c3 = arith.constant 3 : index
    %c0_174 = arith.constant 0 : index
    %c0_175 = arith.constant 0 : index
    %c0_176 = arith.constant 0 : index
    %584 = vector.load %arg5[%c3, %c0_174, %c0_175, %c0_176] : memref<4x8x8x128xf32, #tpu.memory_space<vmem>>, vector<1x8x8x128xf32>
    %585 = vector.shape_cast %584 : vector<1x8x8x128xf32> to vector<8x8x128xf32>
    %586 = vector.shape_cast %583 : vector<8x8x128xf32> to vector<1x8x8x128xf32>
    tpu.vector_store %arg5[%c3, %c0_174, %c0_175, %c0_176], %586 {strides = array<i32>} : memref<4x8x8x128xf32, #tpu.memory_space<vmem>>, vector<1x8x8x128xf32>,
    %587 = arith.addf %579, %583 : vector<8x8x128xf32>
    %cst_177 = arith.constant dense<0.000000e+00> : vector<8x128xf32>
    %588 = vector.multi_reduction <add>, %583, %cst_177 [0] : vector<8x8x128xf32> to vector<8x128xf32>
    %589 = arith.addf %551, %588 : vector<8x128xf32>
    %590 = vector.extract_strided_slice %578 {offsets = [0, 0, 3], sizes = [8, 8, 1], strides = [1, 1, 1]} : vector<8x8x4xf32> to vector<8x8x1xf32>
    %591 = vector.broadcast %590 : vector<8x8x1xf32> to vector<8x8x128xf32>
    %592 = arith.mulf %591, %577 : vector<8x8x128xf32>
    %593 = arith.addf %592, %580 : vector<8x8x128xf32>
    %c127_i32_178 = arith.constant 127 : i32
    %594 = tpu.dynamic_rotate %593 by %c127_i32_178 dim 2 : vector<8x8x128xf32>, i32 -> vector<8x8x128xf32>
    %595 = arith.mulf %594, %575 : vector<8x8x128xf32>
    %c2_i32_179 = arith.constant 2 : i32
    %596 = tpu.dynamic_rotate %576 by %c2_i32_179 dim 2 : vector<8x8x128xf32>, i32 -> vector<8x8x128xf32>
    %597 = arith.mulf %596, %563 : vector<8x8x128xf32>
    %598 = arith.mulf %597, %595 : vector<8x8x128xf32>
    %c2 = arith.constant 2 : index
    %c0_180 = arith.constant 0 : index
    %c0_181 = arith.constant 0 : index
    %c0_182 = arith.constant 0 : index
    %599 = vector.load %arg5[%c2, %c0_180, %c0_181, %c0_182] : memref<4x8x8x128xf32, #tpu.memory_space<vmem>>, vector<1x8x8x128xf32>
    %600 = vector.shape_cast %599 : vector<1x8x8x128xf32> to vector<8x8x128xf32>
    %601 = vector.shape_cast %598 : vector<8x8x128xf32> to vector<1x8x8x128xf32>
    tpu.vector_store %arg5[%c2, %c0_180, %c0_181, %c0_182], %601 {strides = array<i32>} : memref<4x8x8x128xf32, #tpu.memory_space<vmem>>, vector<1x8x8x128xf32>,
    %602 = arith.addf %587, %598 : vector<8x8x128xf32>
    %cst_183 = arith.constant dense<0.000000e+00> : vector<8x128xf32>
    %603 = vector.multi_reduction <add>, %598, %cst_183 [0] : vector<8x8x128xf32> to vector<8x128xf32>
    %604 = arith.addf %550, %603 : vector<8x128xf32>
    %605 = vector.extract_strided_slice %578 {offsets = [0, 0, 2], sizes = [8, 8, 1], strides = [1, 1, 1]} : vector<8x8x4xf32> to vector<8x8x1xf32>
    %606 = vector.broadcast %605 : vector<8x8x1xf32> to vector<8x8x128xf32>
    %607 = arith.mulf %606, %577 : vector<8x8x128xf32>
    %608 = arith.addf %607, %595 : vector<8x8x128xf32>
    %c127_i32_184 = arith.constant 127 : i32
    %609 = tpu.dynamic_rotate %608 by %c127_i32_184 dim 2 : vector<8x8x128xf32>, i32 -> vector<8x8x128xf32>
    %610 = arith.mulf %609, %575 : vector<8x8x128xf32>
    %c1_i32_185 = arith.constant 1 : i32
    %611 = tpu.dynamic_rotate %576 by %c1_i32_185 dim 2 : vector<8x8x128xf32>, i32 -> vector<8x8x128xf32>
    %612 = arith.mulf %611, %557 : vector<8x8x128xf32>
    %613 = arith.mulf %612, %610 : vector<8x8x128xf32>
    %c1 = arith.constant 1 : index
    %c0_186 = arith.constant 0 : index
    %c0_187 = arith.constant 0 : index
    %c0_188 = arith.constant 0 : index
    %614 = vector.load %arg5[%c1, %c0_186, %c0_187, %c0_188] : memref<4x8x8x128xf32, #tpu.memory_space<vmem>>, vector<1x8x8x128xf32>
    %615 = vector.shape_cast %614 : vector<1x8x8x128xf32> to vector<8x8x128xf32>
    %616 = vector.shape_cast %613 : vector<8x8x128xf32> to vector<1x8x8x128xf32>
    tpu.vector_store %arg5[%c1, %c0_186, %c0_187, %c0_188], %616 {strides = array<i32>} : memref<4x8x8x128xf32, #tpu.memory_space<vmem>>, vector<1x8x8x128xf32>,
    %617 = arith.addf %602, %613 : vector<8x8x128xf32>
    %cst_189 = arith.constant dense<0.000000e+00> : vector<8x128xf32>
    %618 = vector.multi_reduction <add>, %613, %cst_189 [0] : vector<8x8x128xf32> to vector<8x128xf32>
    %619 = arith.addf %549, %618 : vector<8x128xf32>
    %620 = vector.extract_strided_slice %578 {offsets = [0, 0, 1], sizes = [8, 8, 1], strides = [1, 1, 1]} : vector<8x8x4xf32> to vector<8x8x1xf32>
    %621 = vector.broadcast %620 : vector<8x8x1xf32> to vector<8x8x128xf32>
    %622 = arith.mulf %621, %577 : vector<8x8x128xf32>
    %623 = arith.addf %622, %610 : vector<8x8x128xf32>
    %c127_i32_190 = arith.constant 127 : i32
    %624 = tpu.dynamic_rotate %623 by %c127_i32_190 dim 2 : vector<8x8x128xf32>, i32 -> vector<8x8x128xf32>
    %625 = arith.mulf %624, %575 : vector<8x8x128xf32>
    %626 = arith.mulf %576, %625 : vector<8x8x128xf32>
    %c0_191 = arith.constant 0 : index
    %c0_192 = arith.constant 0 : index
    %c0_193 = arith.constant 0 : index
    %c0_194 = arith.constant 0 : index
    %627 = vector.load %arg5[%c0_191, %c0_192, %c0_193, %c0_194] : memref<4x8x8x128xf32, #tpu.memory_space<vmem>>, vector<1x8x8x128xf32>
    %628 = vector.shape_cast %627 : vector<1x8x8x128xf32> to vector<8x8x128xf32>
    %629 = vector.shape_cast %626 : vector<8x8x128xf32> to vector<1x8x8x128xf32>
    tpu.vector_store %arg5[%c0_191, %c0_192, %c0_193, %c0_194], %629 {strides = array<i32>} : memref<4x8x8x128xf32, #tpu.memory_space<vmem>>, vector<1x8x8x128xf32>,
    %630 = arith.addf %617, %626 : vector<8x8x128xf32>
    %cst_195 = arith.constant dense<0.000000e+00> : vector<8x128xf32>
    %631 = vector.multi_reduction <add>, %626, %cst_195 [0] : vector<8x8x128xf32> to vector<8x128xf32>
    %632 = arith.addf %548, %631 : vector<8x128xf32>
    %c0_196 = arith.constant 0 : index
    %c0_197 = arith.constant 0 : index
    %c0_198 = arith.constant 0 : index
    %633 = vector.load %arg6[%c0_196, %c0_197, %c0_198] : memref<8x8x128xf32, #tpu.memory_space<vmem>>, vector<8x8x128xf32>
    tpu.vector_store %arg6[%c0_196, %c0_197, %c0_198], %630 {strides = array<i32>} : memref<8x8x128xf32, #tpu.memory_space<vmem>>, vector<8x8x128xf32>,
    %c0_199 = arith.constant 0 : index
    %c0_200 = arith.constant 0 : index
    %c0_201 = arith.constant 0 : index
    %634 = vector.load %arg7[%c0_199, %c0_200, %c0_201] : memref<4x8x128xf32, #tpu.memory_space<vmem>>, vector<1x8x128xf32>
    %635 = vector.shape_cast %634 : vector<1x8x128xf32> to vector<8x128xf32>
    %636 = vector.shape_cast %632 : vector<8x128xf32> to vector<1x8x128xf32>
    tpu.vector_store %arg7[%c0_199, %c0_200, %c0_201], %636 {strides = array<i32>} : memref<4x8x128xf32, #tpu.memory_space<vmem>>, vector<1x8x128xf32>,
    %c1_202 = arith.constant 1 : index
    %c0_203 = arith.constant 0 : index
    %c0_204 = arith.constant 0 : index
    %637 = vector.load %arg7[%c1_202, %c0_203, %c0_204] : memref<4x8x128xf32, #tpu.memory_space<vmem>>, vector<1x8x128xf32>
    %638 = vector.shape_cast %637 : vector<1x8x128xf32> to vector<8x128xf32>
    %639 = vector.shape_cast %619 : vector<8x128xf32> to vector<1x8x128xf32>
    tpu.vector_store %arg7[%c1_202, %c0_203, %c0_204], %639 {strides = array<i32>} : memref<4x8x128xf32, #tpu.memory_space<vmem>>, vector<1x8x128xf32>,
    %c2_205 = arith.constant 2 : index
    %c0_206 = arith.constant 0 : index
    %c0_207 = arith.constant 0 : index
    %640 = vector.load %arg7[%c2_205, %c0_206, %c0_207] : memref<4x8x128xf32, #tpu.memory_space<vmem>>, vector<1x8x128xf32>
    %641 = vector.shape_cast %640 : vector<1x8x128xf32> to vector<8x128xf32>
    %642 = vector.shape_cast %604 : vector<8x128xf32> to vector<1x8x128xf32>
    tpu.vector_store %arg7[%c2_205, %c0_206, %c0_207], %642 {strides = array<i32>} : memref<4x8x128xf32, #tpu.memory_space<vmem>>, vector<1x8x128xf32>,
    %c3_208 = arith.constant 3 : index
    %c0_209 = arith.constant 0 : index
    %c0_210 = arith.constant 0 : index
    %643 = vector.load %arg7[%c3_208, %c0_209, %c0_210] : memref<4x8x128xf32, #tpu.memory_space<vmem>>, vector<1x8x128xf32>
    %644 = vector.shape_cast %643 : vector<1x8x128xf32> to vector<8x128xf32>
    %645 = vector.shape_cast %589 : vector<8x128xf32> to vector<1x8x128xf32>
    tpu.vector_store %arg7[%c3_208, %c0_209, %c0_210], %645 {strides = array<i32>} : memref<4x8x128xf32, #tpu.memory_space<vmem>>, vector<1x8x128xf32>,
    return
  }
  func.func @transform_0(%arg0: i32) -> (i32, i32, i32) {
    %c0_i32 = arith.constant 0 : i32
    %c0_i32_0 = arith.constant 0 : i32
    %c0_i32_1 = arith.constant 0 : i32
    return %c0_i32, %arg0, %c0_i32_0 : i32, i32, i32
  }
  func.func @transform_1(%arg0: i32) -> (i32, i32, i32) {
    %c0_i32 = arith.constant 0 : i32
    %c0_i32_0 = arith.constant 0 : i32
    %c0_i32_1 = arith.constant 0 : i32
    return %c0_i32, %arg0, %c0_i32_0 : i32, i32, i32
  }
  func.func @transform_2(%arg0: i32) -> (i32, i32) {
    %c0_i32 = arith.constant 0 : i32
    %c0_i32_0 = arith.constant 0 : i32
    return %arg0, %c0_i32 : i32, i32
  }
  func.func @transform_3(%arg0: i32) -> (i32, i32, i32) {
    %c0_i32 = arith.constant 0 : i32
    %c0_i32_0 = arith.constant 0 : i32
    %c0_i32_1 = arith.constant 0 : i32
    return %c0_i32, %arg0, %c0_i32_0 : i32, i32, i32
  }
  func.func @transform_4(%arg0: i32) -> (i32, i32, i32, i32) {
    %c0_i32 = arith.constant 0 : i32
    %c0_i32_0 = arith.constant 0 : i32
    %c0_i32_1 = arith.constant 0 : i32
    %c0_i32_2 = arith.constant 0 : i32
    return %c0_i32, %c0_i32_0, %arg0, %c0_i32_1 : i32, i32, i32, i32
  }
  func.func @transform_5(%arg0: i32) -> (i32, i32, i32) {
    %c0_i32 = arith.constant 0 : i32
    %c0_i32_0 = arith.constant 0 : i32
    %c0_i32_1 = arith.constant 0 : i32
    return %c0_i32, %arg0, %c0_i32_0 : i32, i32, i32
  }
  func.func @transform_6(%arg0: i32) -> (i32, i32, i32) {
    %c0_i32 = arith.constant 0 : i32
    %c0_i32_0 = arith.constant 0 : i32
    %c0_i32_1 = arith.constant 0 : i32
    return %c0_i32, %arg0, %c0_i32_0 : i32, i32, i32
  }
  func.func @transform_7(%arg0: i32) -> (i32, i32) {
    %c0_i32 = arith.constant 0 : i32
    %c0_i32_0 = arith.constant 0 : i32
    return %arg0, %c0_i32 : i32, i32
  }
}

</mosaic_0001>

<llo_original>
// kernel: tpu_custom_call.1
$region0: #{tpu_custom_call.1}
  #allocation0 [shape = 'u32[]', space=smem, size = 0x4, offset = 0x4, fixed_abs, tag = 'smem constant byte address 0x4 - core index']
  #allocation1 [shape = 'u32[144,128]{1,0:T(1,128)}', space=vmem, size = 0x12000, scoped, tag = 'internal scratch']
  #allocation2 [shape = 'f32[8,8,128]{2,1,0:T(8,128)}', space=vmem, size = 0x8000, scoped, tag = 'scratch operand']
  #allocation3 [shape = 'f32[8,8,128]{2,1,0:T(8,128)}', space=vmem, size = 0x8000, scoped, tag = 'scratch operand']
  %s0 = inlined_call_operand.vmem [shape: f32[8,8,4], index: 0, kind: input, shape index: {}]
  %s1 = inlined_call_operand.vmem [shape: f32[8,8,1], index: 1, kind: input, shape index: {}]
  %s2 = inlined_call_operand.vmem [shape: f32[8,10], index: 2, kind: input, shape index: {}]
  %s3 = inlined_call_operand.vmem [shape: f32[8,8,4], index: 3, kind: output, shape index: {0}]
  %s4 = inlined_call_operand.hbm [shape: f32[4,8,8,128], index: 4, kind: output, shape index: {1}]
  %s5 = inlined_call_operand.hbm [shape: f32[8,8,128], index: 5, kind: output, shape index: {2}]
  %s6 = inlined_call_operand.hbm [shape: f32[4,8,128], index: 6, kind: output, shape index: {3}]
  %s7 = inlined_call_operand.vmem [shape: f32[8,1], index: 7, kind: output, shape index: {4}]
  %8 = xla_tuple %s3, %s4, %s5, %s6, %s7
  %s9 = sld [smem:[#allocation0]]
  $region54: #{tpu_custom_call.1} parent=0
    _
  %s11 = ssub.s32 1, %s9
  %s12 = scalar_select 0, %s11, %s9
  $region1: #{tpu_custom_call.1} parent=0
    #allocation4 [shape = 'u8[131072]{0}', space=vmem, size = 0x20000, scoped, tag = 'output window, operand 1, single buffered']
    #allocation5 [shape = 's32[1]{0}', space=sflag, size = 0x4, scoped, tag = 'scoped memory for tpu_custom_call.1']
    #allocation6 [shape = 'u8[32768]{0}', space=vmem, size = 0x8000, scoped, tag = 'output window, operand 2, single buffered']
    #allocation7 [shape = 's32[1]{0}', space=sflag, size = 0x4, scoped, tag = 'scoped memory for tpu_custom_call.1']
    #allocation8 [shape = 'u8[16384]{0}', space=vmem, size = 0x4000, scoped, tag = 'output window, operand 3, single buffered']
    %13 = vsyncpa [#allocation5], 0
    %14 = vsyncpa [#allocation7], 0
    // Predicated region
    $region2: #{tpu_custom_call.1} parent=1 // pred_check
      _
    $region3: #{tpu_custom_call.1} parent=1 // pred_check_branch
      %16 = sbr.rel (0) target = $region5
    $region4: #{tpu_custom_call.1} parent=1 // pred_region
      _
    $region5: #{tpu_custom_call.1} parent=1 // pred_fallthru
      _
    // Predicated region
    $region6: #{tpu_custom_call.1} parent=1 // pred_check
      _
    $region7: #{tpu_custom_call.1} parent=1 // pred_check_branch
      %18 = sbr.rel (0) target = $region9
    $region8: #{tpu_custom_call.1} parent=1 // pred_region
      _
    $region9: #{tpu_custom_call.1} parent=1 // pred_fallthru
      _
    // Predicated region
    $region10: #{tpu_custom_call.1} parent=1 // pred_check
      _
    $region11: #{tpu_custom_call.1} parent=1 // pred_check_branch
      %20 = sbr.rel (0) target = $region13
    $region12: #{tpu_custom_call.1} parent=1 // pred_region
      _
    $region13: #{tpu_custom_call.1} parent=1 // pred_fallthru
      _
    %v21 = vld [vmem:[%s0] sm:$0xff]
    %v22 = vld [vmem:[%s0 + $0x8] sm:$0xff]
    %v23 = vld [vmem:[%s0 + $0x10] sm:$0xff]
    %v24 = vld [vmem:[%s0 + $0x18] sm:$0xff]
    %v25 = vld [vmem:[%s0 + $0x20] sm:$0xff]
    %v26 = vld [vmem:[%s0 + $0x28] sm:$0xff]
    %v27 = vld [vmem:[%s0 + $0x30] sm:$0xff]
    %v28 = vld [vmem:[%s0 + $0x38] sm:$0xff]
    %v29 = vld [vmem:[%s1] sm:$0xff]
    %v30 = vld [vmem:[%s1 + $0x8] sm:$0xff]
    %v31 = vld [vmem:[%s1 + $0x10] sm:$0xff]
    %v32 = vld [vmem:[%s1 + $0x18] sm:$0xff]
    %v33 = vld [vmem:[%s1 + $0x20] sm:$0xff]
    %v34 = vld [vmem:[%s1 + $0x28] sm:$0xff]
    %v35 = vld [vmem:[%s1 + $0x30] sm:$0xff]
    %v36 = vld [vmem:[%s1 + $0x38] sm:$0xff]
    %v37 = vlaneseq
    %v38 = vand.u32 %v37, 127
    %vm39 = vcmp.eq.s32.totalorder %v38, 0
    %vm40 = vcmp.gt.f32.partialorder %v29, 0.5
    %vm41 = vcmp.gt.f32.partialorder %v30, 0.5
    %vm42 = vcmp.gt.f32.partialorder %v31, 0.5
    %vm43 = vcmp.gt.f32.partialorder %v32, 0.5
    %vm44 = vcmp.gt.f32.partialorder %v33, 0.5
    %vm45 = vcmp.gt.f32.partialorder %v34, 0.5
    %vm46 = vcmp.gt.f32.partialorder %v35, 0.5
    %vm47 = vcmp.gt.f32.partialorder %v36, 0.5
    %v48 = vsel %vm39, 1, 0
    %vm49 = vcmp.eq.s32.totalorder %v48, 1
    %v50 = vsel %vm40, 1, 0
    %v51 = vsel %vm41, 1, 0
    %v52 = vsel %vm42, 1, 0
    %v53 = vsel %vm43, 1, 0
    %v54 = vsel %vm44, 1, 0
    %v55 = vsel %vm45, 1, 0
    %v56 = vsel %vm46, 1, 0
    %v57 = vsel %vm47, 1, 0
    %58 = vset.pattern.permute.xlu0 0
    %59 = vperm.xlu0 %58, %v50
    %v60 = vpop.permute.xlu0 %59
    %61 = vset.pattern.permute.xlu0 0
    %62 = vperm.xlu0 %61, %v51
    %v63 = vpop.permute.xlu0 %62
    %64 = vset.pattern.permute.xlu0 0
    %65 = vperm.xlu0 %64, %v52
    %v66 = vpop.permute.xlu0 %65
    %67 = vset.pattern.permute.xlu0 0
    %68 = vperm.xlu0 %67, %v53
    %v69 = vpop.permute.xlu0 %68
    %70 = vset.pattern.permute.xlu0 0
    %71 = vperm.xlu0 %70, %v54
    %v72 = vpop.permute.xlu0 %71
    %73 = vset.pattern.permute.xlu0 0
    %74 = vperm.xlu0 %73, %v55
    %v75 = vpop.permute.xlu0 %74
    %76 = vset.pattern.permute.xlu0 0
    %77 = vperm.xlu0 %76, %v56
    %v78 = vpop.permute.xlu0 %77
    %79 = vset.pattern.permute.xlu0 0
    %80 = vperm.xlu0 %79, %v57
    %v81 = vpop.permute.xlu0 %80
    %vm82 = vcmp.eq.s32.totalorder %v60, 1
    %vm83 = vcmp.eq.s32.totalorder %v63, 1
    %vm84 = vcmp.eq.s32.totalorder %v66, 1
    %vm85 = vcmp.eq.s32.totalorder %v69, 1
    %vm86 = vcmp.eq.s32.totalorder %v72, 1
    %vm87 = vcmp.eq.s32.totalorder %v75, 1
    %vm88 = vcmp.eq.s32.totalorder %v78, 1
    %vm89 = vcmp.eq.s32.totalorder %v81, 1
    %vm90 = vmor %vm49, %vm82
    %vm91 = vmor %vm49, %vm83
    %vm92 = vmor %vm49, %vm84
    %vm93 = vmor %vm49, %vm85
    %vm94 = vmor %vm49, %vm86
    %vm95 = vmor %vm49, %vm87
    %vm96 = vmor %vm49, %vm88
    %vm97 = vmor %vm49, %vm89
    %v98 = vsel %vm90, 0.0, -10000.0
    %v99 = vsel %vm91, 0.0, -10000.0
    %v100 = vsel %vm92, 0.0, -10000.0
    %v101 = vsel %vm93, 0.0, -10000.0
    %v102 = vsel %vm94, 0.0, -10000.0
    %v103 = vsel %vm95, 0.0, -10000.0
    %v104 = vsel %vm96, 0.0, -10000.0
    %v105 = vsel %vm97, 0.0, -10000.0
    %v106 = vadd.f32 %v21, %v98
    %v107 = vadd.f32 %v22, %v99
    %v108 = vadd.f32 %v23, %v100
    %v109 = vadd.f32 %v24, %v101
    %v110 = vadd.f32 %v25, %v102
    %v111 = vadd.f32 %v26, %v103
    %v112 = vadd.f32 %v27, %v104
    %v113 = vadd.f32 %v28, %v105
    %vm114 = vcmask 31744
    %v115 = vsel %vm114, %v106, -inf
    %116 = vmax.xlane.f32.xlu0 %v115
    %v117 = vpop.xlane.xlu0 %116
    %v118 = vsel %vm114, %v107, -inf
    %119 = vmax.xlane.f32.xlu0 %v118
    %v120 = vpop.xlane.xlu0 %119
    %v121 = vsel %vm114, %v108, -inf
    %122 = vmax.xlane.f32.xlu0 %v121
    %v123 = vpop.xlane.xlu0 %122
    %v124 = vsel %vm114, %v109, -inf
    %125 = vmax.xlane.f32.xlu0 %v124
    %v126 = vpop.xlane.xlu0 %125
    %v127 = vsel %vm114, %v110, -inf
    %128 = vmax.xlane.f32.xlu0 %v127
    %v129 = vpop.xlane.xlu0 %128
    %v130 = vsel %vm114, %v111, -inf
    %131 = vmax.xlane.f32.xlu0 %v130
    %v132 = vpop.xlane.xlu0 %131
    %v133 = vsel %vm114, %v112, -inf
    %134 = vmax.xlane.f32.xlu0 %v133
    %v135 = vpop.xlane.xlu0 %134
    %v136 = vsel %vm114, %v113, -inf
    %137 = vmax.xlane.f32.xlu0 %v136
    %v138 = vpop.xlane.xlu0 %137
    %v139 = vsub.f32 %v106, %v117
    %v140 = vsub.f32 %v107, %v120
    %v141 = vsub.f32 %v108, %v123
    %v142 = vsub.f32 %v109, %v126
    %v143 = vsub.f32 %v110, %v129
    %v144 = vsub.f32 %v111, %v132
    %v145 = vsub.f32 %v112, %v135
    %v146 = vsub.f32 %v113, %v138
    %v147 = vmul.f32 %v139, 1.442695
    %v148 = vpow.pop %v147
    %v149 = vmul.f32 %v140, 1.442695
    %v150 = vpow.pop %v149
    %v151 = vmul.f32 %v141, 1.442695
    %v152 = vpow.pop %v151
    %v153 = vmul.f32 %v142, 1.442695
    %v154 = vpow.pop %v153
    %v155 = vmul.f32 %v143, 1.442695
    %v156 = vpow.pop %v155
    %v157 = vmul.f32 %v144, 1.442695
    %v158 = vpow.pop %v157
    %v159 = vmul.f32 %v145, 1.442695
    %v160 = vpow.pop %v159
    %v161 = vmul.f32 %v146, 1.442695
    %v162 = vpow.pop %v161
    %v163 = vsel %vm114, %v148, 0.0
    %164 = vadd.xlane.f32.xlu0 %v163
    %v165 = vpop.xlane.xlu0 %164
    %v166 = vsel %vm114, %v150, 0.0
    %167 = vadd.xlane.f32.xlu0 %v166
    %v168 = vpop.xlane.xlu0 %167
    %v169 = vsel %vm114, %v152, 0.0
    %170 = vadd.xlane.f32.xlu0 %v169
    %v171 = vpop.xlane.xlu0 %170
    %v172 = vsel %vm114, %v154, 0.0
    %173 = vadd.xlane.f32.xlu0 %v172
    %v174 = vpop.xlane.xlu0 %173
    %v175 = vsel %vm114, %v156, 0.0
    %176 = vadd.xlane.f32.xlu0 %v175
    %v177 = vpop.xlane.xlu0 %176
    %v178 = vsel %vm114, %v158, 0.0
    %179 = vadd.xlane.f32.xlu0 %v178
    %v180 = vpop.xlane.xlu0 %179
    %v181 = vsel %vm114, %v160, 0.0
    %182 = vadd.xlane.f32.xlu0 %v181
    %v183 = vpop.xlane.xlu0 %182
    %v184 = vsel %vm114, %v162, 0.0
    %185 = vadd.xlane.f32.xlu0 %v184
    %v186 = vpop.xlane.xlu0 %185
    %v187 = vrcp.pop %v165
    %v188 = vmul.f32 %v148, %v187
    %v189 = vrcp.pop %v168
    %v190 = vmul.f32 %v150, %v189
    %v191 = vrcp.pop %v171
    %v192 = vmul.f32 %v152, %v191
    %v193 = vrcp.pop %v174
    %v194 = vmul.f32 %v154, %v193
    %v195 = vrcp.pop %v177
    %v196 = vmul.f32 %v156, %v195
    %v197 = vrcp.pop %v180
    %v198 = vmul.f32 %v158, %v197
    %v199 = vrcp.pop %v183
    %v200 = vmul.f32 %v160, %v199
    %v201 = vrcp.pop %v186
    %v202 = vmul.f32 %v162, %v201
    %203 = vst.msk [vmem:[%s3] sm:$0xff] %vm114, %v188
    %204 = vst.msk [vmem:[%s3 + $0x8] sm:$0xff] %vm114, %v190
    %205 = vst.msk [vmem:[%s3 + $0x10] sm:$0xff] %vm114, %v192
    %206 = vst.msk [vmem:[%s3 + $0x18] sm:$0xff] %vm114, %v194
    %207 = vst.msk [vmem:[%s3 + $0x20] sm:$0xff] %vm114, %v196
    %208 = vst.msk [vmem:[%s3 + $0x28] sm:$0xff] %vm114, %v198
    %209 = vst.msk [vmem:[%s3 + $0x30] sm:$0xff] %vm114, %v200
    %210 = vst.msk [vmem:[%s3 + $0x38] sm:$0xff] %vm114, %v202
    %vm211 = vcmp.ge.s32.totalorder %v38, 1
    %v212 = vsel %vm211, 1, 0
    %v213 = vcvt.s32.f32 %v212
    %vm214 = vcmp.ge.s32.totalorder %v38, 2
    %v215 = vsel %vm214, 1, 0
    %v216 = vcvt.s32.f32 %v215
    %vm217 = vcmp.ge.s32.totalorder %v38, 3
    %v218 = vsel %vm217, 1, 0
    %v219 = vcvt.s32.f32 %v218
    %vm220 = vcmp.lt.s32.totalorder %v38, 10
    %v221 = vsel %vm220, 1, 0
    %v222 = vcvt.s32.f32 %v221
    %vm223 = vcmp.lt.s32.totalorder %v38, 9
    %v224 = vsel %vm223, 1, 0
    %v225 = vcvt.s32.f32 %v224
    %vm226 = vcmp.lt.s32.totalorder %v38, 8
    %v227 = vsel %vm226, 1, 0
    %v228 = vcvt.s32.f32 %v227
    %v229 = vcvt.s32.f32 %v48
    %230 = vst [vmem:[#allocation2] sm:$0xff] %v229
    %v231 = vld [vmem:[%s3] sm:$0xff]
    %233 = vset.pattern.permute.xlu0 0
    %234 = vperm.xlu0 %233, %v231
    %v235 = vpop.permute.xlu0 %234
    %v237 = vmul.f32 %v235, %v229
    %238 = vrot.lane.b32.xlu0 %v229, 1
    %v239 = vpop.permute.xlu0 %238
    %v240 = vmul.f32 %v239, %v213
    %241 = vset.pattern.permute.xlu0 1
    %242 = vperm.xlu0 %241, %v231
    %v243 = vpop.permute.xlu0 %242
    %v245 = vmul.f32 %v243, %v240
    %v246 = vadd.f32 %v237, %v245
    %247 = vrot.lane.b32.xlu0 %v229, 2
    %v248 = vpop.permute.xlu0 %247
    %v249 = vmul.f32 %v248, %v216
    %250 = vset.pattern.permute.xlu0 2
    %251 = vperm.xlu0 %250, %v231
    %v252 = vpop.permute.xlu0 %251
    %v254 = vmul.f32 %v252, %v249
    %v255 = vadd.f32 %v246, %v254
    %256 = vrot.lane.b32.xlu0 %v229, 3
    %v257 = vpop.permute.xlu0 %256
    %v258 = vmul.f32 %v257, %v219
    %259 = vset.pattern.permute.xlu0 3
    %260 = vperm.xlu0 %259, %v231
    %v261 = vpop.permute.xlu0 %260
    %v263 = vmul.f32 %v261, %v258
    %v264 = vadd.f32 %v255, %v263
    %s265 = scalar_lea.vmem [#allocation2], 8
    %266 = vst [vmem:[%s265] sm:$0xff] %v264
    %s267 = scalar_lea.vmem %s3, 8
    %v268 = vld [vmem:[%s267] sm:$0xff]
    %270 = vset.pattern.permute.xlu0 0
    %271 = vperm.xlu0 %270, %v268
    %v272 = vpop.permute.xlu0 %271
    %v274 = vmul.f32 %v272, %v264
    %275 = vrot.lane.b32.xlu0 %v264, 1
    %v276 = vpop.permute.xlu0 %275
    %v277 = vmul.f32 %v276, %v213
    %278 = vset.pattern.permute.xlu0 1
    %279 = vperm.xlu0 %278, %v268
    %v280 = vpop.permute.xlu0 %279
    %v282 = vmul.f32 %v280, %v277
    %v283 = vadd.f32 %v274, %v282
    %284 = vrot.lane.b32.xlu0 %v264, 2
    %v285 = vpop.permute.xlu0 %284
    %v286 = vmul.f32 %v285, %v216
    %287 = vset.pattern.permute.xlu0 2
    %288 = vperm.xlu0 %287, %v268
    %v289 = vpop.permute.xlu0 %288
    %v291 = vmul.f32 %v289, %v286
    %v292 = vadd.f32 %v283, %v291
    %293 = vrot.lane.b32.xlu0 %v264, 3
    %v294 = vpop.permute.xlu0 %293
    %v295 = vmul.f32 %v294, %v219
    %296 = vset.pattern.permute.xlu0 3
    %297 = vperm.xlu0 %296, %v268
    %v298 = vpop.permute.xlu0 %297
    %v300 = vmul.f32 %v298, %v295
    %v301 = vadd.f32 %v292, %v300
    %s302 = scalar_lea.vmem [#allocation2], 16
    %303 = vst [vmem:[%s302] sm:$0xff] %v301
    %s304 = scalar_lea.vmem %s3, 16
    %v305 = vld [vmem:[%s304] sm:$0xff]
    %307 = vset.pattern.permute.xlu0 0
    %308 = vperm.xlu0 %307, %v305
    %v309 = vpop.permute.xlu0 %308
    %v311 = vmul.f32 %v309, %v301
    %312 = vrot.lane.b32.xlu0 %v301, 1
    %v313 = vpop.permute.xlu0 %312
    %v314 = vmul.f32 %v313, %v213
    %315 = vset.pattern.permute.xlu0 1
    %316 = vperm.xlu0 %315, %v305
    %v317 = vpop.permute.xlu0 %316
    %v319 = vmul.f32 %v317, %v314
    %v320 = vadd.f32 %v311, %v319
    %321 = vrot.lane.b32.xlu0 %v301, 2
    %v322 = vpop.permute.xlu0 %321
    %v323 = vmul.f32 %v322, %v216
    %324 = vset.pattern.permute.xlu0 2
    %325 = vperm.xlu0 %324, %v305
    %v326 = vpop.permute.xlu0 %325
    %v328 = vmul.f32 %v326, %v323
    %v329 = vadd.f32 %v320, %v328
    %330 = vrot.lane.b32.xlu0 %v301, 3
    %v331 = vpop.permute.xlu0 %330
    %v332 = vmul.f32 %v331, %v219
    %333 = vset.pattern.permute.xlu0 3
    %334 = vperm.xlu0 %333, %v305
    %v335 = vpop.permute.xlu0 %334
    %v337 = vmul.f32 %v335, %v332
    %v338 = vadd.f32 %v329, %v337
    %s339 = scalar_lea.vmem [#allocation2], 24
    %340 = vst [vmem:[%s339] sm:$0xff] %v338
    %s341 = scalar_lea.vmem %s3, 24
    %v342 = vld [vmem:[%s341] sm:$0xff]
    %344 = vset.pattern.permute.xlu0 0
    %345 = vperm.xlu0 %344, %v342
    %v346 = vpop.permute.xlu0 %345
    %v348 = vmul.f32 %v346, %v338
    %349 = vrot.lane.b32.xlu0 %v338, 1
    %v350 = vpop.permute.xlu0 %349
    %v351 = vmul.f32 %v350, %v213
    %352 = vset.pattern.permute.xlu0 1
    %353 = vperm.xlu0 %352, %v342
    %v354 = vpop.permute.xlu0 %353
    %v356 = vmul.f32 %v354, %v351
    %v357 = vadd.f32 %v348, %v356
    %358 = vrot.lane.b32.xlu0 %v338, 2
    %v359 = vpop.permute.xlu0 %358
    %v360 = vmul.f32 %v359, %v216
    %361 = vset.pattern.permute.xlu0 2
    %362 = vperm.xlu0 %361, %v342
    %v363 = vpop.permute.xlu0 %362
    %v365 = vmul.f32 %v363, %v360
    %v366 = vadd.f32 %v357, %v365
    %367 = vrot.lane.b32.xlu0 %v338, 3
    %v368 = vpop.permute.xlu0 %367
    %v369 = vmul.f32 %v368, %v219
    %370 = vset.pattern.permute.xlu0 3
    %371 = vperm.xlu0 %370, %v342
    %v372 = vpop.permute.xlu0 %371
    %v374 = vmul.f32 %v372, %v369
    %v375 = vadd.f32 %v366, %v374
    %s376 = scalar_lea.vmem [#allocation2], 32
    %377 = vst [vmem:[%s376] sm:$0xff] %v375
    %s378 = scalar_lea.vmem %s3, 32
    %v379 = vld [vmem:[%s378] sm:$0xff]
    %381 = vset.pattern.permute.xlu0 0
    %382 = vperm.xlu0 %381, %v379
    %v383 = vpop.permute.xlu0 %382
    %v385 = vmul.f32 %v383, %v375
    %386 = vrot.lane.b32.xlu0 %v375, 1
    %v387 = vpop.permute.xlu0 %386
    %v388 = vmul.f32 %v387, %v213
    %389 = vset.pattern.permute.xlu0 1
    %390 = vperm.xlu0 %389, %v379
    %v391 = vpop.permute.xlu0 %390
    %v393 = vmul.f32 %v391, %v388
    %v394 = vadd.f32 %v385, %v393
    %395 = vrot.lane.b32.xlu0 %v375, 2
    %v396 = vpop.permute.xlu0 %395
    %v397 = vmul.f32 %v396, %v216
    %398 = vset.pattern.permute.xlu0 2
    %399 = vperm.xlu0 %398, %v379
    %v400 = vpop.permute.xlu0 %399
    %v402 = vmul.f32 %v400, %v397
    %v403 = vadd.f32 %v394, %v402
    %404 = vrot.lane.b32.xlu0 %v375, 3
    %v405 = vpop.permute.xlu0 %404
    %v406 = vmul.f32 %v405, %v219
    %407 = vset.pattern.permute.xlu0 3
    %408 = vperm.xlu0 %407, %v379
    %v409 = vpop.permute.xlu0 %408
    %v411 = vmul.f32 %v409, %v406
    %v412 = vadd.f32 %v403, %v411
    %s413 = scalar_lea.vmem [#allocation2], 40
    %414 = vst [vmem:[%s413] sm:$0xff] %v412
    %s415 = scalar_lea.vmem %s3, 40
    %v416 = vld [vmem:[%s415] sm:$0xff]
    %418 = vset.pattern.permute.xlu0 0
    %419 = vperm.xlu0 %418, %v416
    %v420 = vpop.permute.xlu0 %419
    %v422 = vmul.f32 %v420, %v412
    %423 = vrot.lane.b32.xlu0 %v412, 1
    %v424 = vpop.permute.xlu0 %423
    %v425 = vmul.f32 %v424, %v213
    %426 = vset.pattern.permute.xlu0 1
    %427 = vperm.xlu0 %426, %v416
    %v428 = vpop.permute.xlu0 %427
    %v430 = vmul.f32 %v428, %v425
    %v431 = vadd.f32 %v422, %v430
    %432 = vrot.lane.b32.xlu0 %v412, 2
    %v433 = vpop.permute.xlu0 %432
    %v434 = vmul.f32 %v433, %v216
    %435 = vset.pattern.permute.xlu0 2
    %436 = vperm.xlu0 %435, %v416
    %v437 = vpop.permute.xlu0 %436
    %v439 = vmul.f32 %v437, %v434
    %v440 = vadd.f32 %v431, %v439
    %441 = vrot.lane.b32.xlu0 %v412, 3
    %v442 = vpop.permute.xlu0 %441
    %v443 = vmul.f32 %v442, %v219
    %444 = vset.pattern.permute.xlu0 3
    %445 = vperm.xlu0 %444, %v416
    %v446 = vpop.permute.xlu0 %445
    %v448 = vmul.f32 %v446, %v443
    %v449 = vadd.f32 %v440, %v448
    %s450 = scalar_lea.vmem [#allocation2], 48
    %451 = vst [vmem:[%s450] sm:$0xff] %v449
    %s452 = scalar_lea.vmem %s3, 48
    %v453 = vld [vmem:[%s452] sm:$0xff]
    %455 = vset.pattern.permute.xlu0 0
    %456 = vperm.xlu0 %455, %v453
    %v457 = vpop.permute.xlu0 %456
    %v459 = vmul.f32 %v457, %v449
    %460 = vrot.lane.b32.xlu0 %v449, 1
    %v461 = vpop.permute.xlu0 %460
    %v462 = vmul.f32 %v461, %v213
    %463 = vset.pattern.permute.xlu0 1
    %464 = vperm.xlu0 %463, %v453
    %v465 = vpop.permute.xlu0 %464
    %v467 = vmul.f32 %v465, %v462
    %v468 = vadd.f32 %v459, %v467
    %469 = vrot.lane.b32.xlu0 %v449, 2
    %v470 = vpop.permute.xlu0 %469
    %v471 = vmul.f32 %v470, %v216
    %472 = vset.pattern.permute.xlu0 2
    %473 = vperm.xlu0 %472, %v453
    %v474 = vpop.permute.xlu0 %473
    %v476 = vmul.f32 %v474, %v471
    %v477 = vadd.f32 %v468, %v476
    %478 = vrot.lane.b32.xlu0 %v449, 3
    %v479 = vpop.permute.xlu0 %478
    %v480 = vmul.f32 %v479, %v219
    %481 = vset.pattern.permute.xlu0 3
    %482 = vperm.xlu0 %481, %v453
    %v483 = vpop.permute.xlu0 %482
    %v485 = vmul.f32 %v483, %v480
    %v486 = vadd.f32 %v477, %v485
    %s487 = scalar_lea.vmem [#allocation2], 56
    %488 = vst [vmem:[%s487] sm:$0xff] %v486
    %s489 = scalar_lea.vmem %s3, 56
    %v490 = vld [vmem:[%s489] sm:$0xff]
    %492 = vset.pattern.permute.xlu0 0
    %493 = vperm.xlu0 %492, %v490
    %v494 = vpop.permute.xlu0 %493
    %v496 = vmul.f32 %v494, %v486
    %497 = vrot.lane.b32.xlu0 %v486, 1
    %v498 = vpop.permute.xlu0 %497
    %v499 = vmul.f32 %v498, %v213
    %500 = vset.pattern.permute.xlu0 1
    %501 = vperm.xlu0 %500, %v490
    %v502 = vpop.permute.xlu0 %501
    %v504 = vmul.f32 %v502, %v499
    %v505 = vadd.f32 %v496, %v504
    %506 = vrot.lane.b32.xlu0 %v486, 2
    %v507 = vpop.permute.xlu0 %506
    %v508 = vmul.f32 %v507, %v216
    %509 = vset.pattern.permute.xlu0 2
    %510 = vperm.xlu0 %509, %v490
    %v511 = vpop.permute.xlu0 %510
    %v513 = vmul.f32 %v511, %v508
    %v514 = vadd.f32 %v505, %v513
    %515 = vrot.lane.b32.xlu0 %v486, 3
    %v516 = vpop.permute.xlu0 %515
    %v517 = vmul.f32 %v516, %v219
    %518 = vset.pattern.permute.xlu0 3
    %519 = vperm.xlu0 %518, %v490
    %v520 = vpop.permute.xlu0 %519
    %v522 = vmul.f32 %v520, %v517
    %v523 = vadd.f32 %v514, %v522
    %v524 = vld [vmem:[%s2] sm:$0xff]
    %vm525 = vcmask 80896
    %v526 = vsel %vm525, %v524, 0.0
    %527 = vadd.xlane.f32.xlu0 %v526
    %v528 = vpop.xlane.xlu0 %527
    %v529 = vcvt.f32.s32.to.zero.pseudo %v528
    %vm530 = vcmp.eq.s32.totalorder %v38, %v529
    %v531 = vsel %vm530, 1, 0
    %v532 = vcvt.s32.f32 %v531
    %v533 = vmul.f32 %v523, %v532
    %534 = vadd.xlane.f32.xlu0 %v533
    %v535 = vpop.xlane.xlu0 %534
    %v536 = vlog2.pop %v535
    %v537 = vmul.f32 %v536, 0.6931472
    %vm538 = vcmask 7168
    %539 = vst.msk [vmem:[%s7] sm:$0xff] %vm538, %v537
    %vm540 = vcmp.gt.f32.partialorder %v535, 0.0
    %v541 = vrcp.pop %v535
    %v542 = vmul.f32 1.0, %v541
    %v543 = vsel %vm540, %v542, 0.0
    %v544 = vmul.f32 %v532, %v543
    %s545 = scalar_lea.vmem [#allocation3], 56
    %546 = vst [vmem:[%s545] sm:$0xff] %v544
    %v547 = vld [vmem:[%s489] sm:$0xff]
    %549 = vset.pattern.permute.xlu0 0
    %550 = vperm.xlu0 %549, %v547
    %v551 = vpop.permute.xlu0 %550
    %v553 = vmul.f32 %v551, %v544
    %554 = vrot.lane.b32.xlu0 %v544, 127
    %v555 = vpop.permute.xlu0 %554
    %v556 = vmul.f32 %v555, %v222
    %557 = vset.pattern.permute.xlu0 1
    %558 = vperm.xlu0 %557, %v547
    %v559 = vpop.permute.xlu0 %558
    %v561 = vmul.f32 %v559, %v556
    %v562 = vadd.f32 %v553, %v561
    %563 = vrot.lane.b32.xlu0 %v544, 126
    %v564 = vpop.permute.xlu0 %563
    %v565 = vmul.f32 %v564, %v225
    %566 = vset.pattern.permute.xlu0 2
    %567 = vperm.xlu0 %566, %v547
    %v568 = vpop.permute.xlu0 %567
    %v570 = vmul.f32 %v568, %v565
    %v571 = vadd.f32 %v562, %v570
    %572 = vrot.lane.b32.xlu0 %v544, 125
    %v573 = vpop.permute.xlu0 %572
    %v574 = vmul.f32 %v573, %v228
    %575 = vset.pattern.permute.xlu0 3
    %576 = vperm.xlu0 %575, %v547
    %v577 = vpop.permute.xlu0 %576
    %v579 = vmul.f32 %v577, %v574
    %v580 = vadd.f32 %v571, %v579
    %s581 = scalar_lea.vmem [#allocation3], 48
    %582 = vst [vmem:[%s581] sm:$0xff] %v580
    %v583 = vld [vmem:[%s452] sm:$0xff]
    %585 = vset.pattern.permute.xlu0 0
    %586 = vperm.xlu0 %585, %v583
    %v587 = vpop.permute.xlu0 %586
    %v589 = vmul.f32 %v587, %v580
    %590 = vrot.lane.b32.xlu0 %v580, 127
    %v591 = vpop.permute.xlu0 %590
    %v592 = vmul.f32 %v591, %v222
    %593 = vset.pattern.permute.xlu0 1
    %594 = vperm.xlu0 %593, %v583
    %v595 = vpop.permute.xlu0 %594
    %v597 = vmul.f32 %v595, %v592
    %v598 = vadd.f32 %v589, %v597
    %599 = vrot.lane.b32.xlu0 %v580, 126
    %v600 = vpop.permute.xlu0 %599
    %v601 = vmul.f32 %v600, %v225
    %602 = vset.pattern.permute.xlu0 2
    %603 = vperm.xlu0 %602, %v583
    %v604 = vpop.permute.xlu0 %603
    %v606 = vmul.f32 %v604, %v601
    %v607 = vadd.f32 %v598, %v606
    %608 = vrot.lane.b32.xlu0 %v580, 125
    %v609 = vpop.permute.xlu0 %608
    %v610 = vmul.f32 %v609, %v228
    %611 = vset.pattern.permute.xlu0 3
    %612 = vperm.xlu0 %611, %v583
    %v613 = vpop.permute.xlu0 %612
    %v615 = vmul.f32 %v613, %v610
    %v616 = vadd.f32 %v607, %v615
    %s617 = scalar_lea.vmem [#allocation3], 40
    %618 = vst [vmem:[%s617] sm:$0xff] %v616
    %v619 = vld [vmem:[%s415] sm:$0xff]
    %621 = vset.pattern.permute.xlu0 0
    %622 = vperm.xlu0 %621, %v619
    %v623 = vpop.permute.xlu0 %622
    %v625 = vmul.f32 %v623, %v616
    %626 = vrot.lane.b32.xlu0 %v616, 127
    %v627 = vpop.permute.xlu0 %626
    %v628 = vmul.f32 %v627, %v222
    %629 = vset.pattern.permute.xlu0 1
    %630 = vperm.xlu0 %629, %v619
    %v631 = vpop.permute.xlu0 %630
    %v633 = vmul.f32 %v631, %v628
    %v634 = vadd.f32 %v625, %v633
    %635 = vrot.lane.b32.xlu0 %v616, 126
    %v636 = vpop.permute.xlu0 %635
    %v637 = vmul.f32 %v636, %v225
    %638 = vset.pattern.permute.xlu0 2
    %639 = vperm.xlu0 %638, %v619
    %v640 = vpop.permute.xlu0 %639
    %v642 = vmul.f32 %v640, %v637
    %v643 = vadd.f32 %v634, %v642
    %644 = vrot.lane.b32.xlu0 %v616, 125
    %v645 = vpop.permute.xlu0 %644
    %v646 = vmul.f32 %v645, %v228
    %647 = vset.pattern.permute.xlu0 3
    %648 = vperm.xlu0 %647, %v619
    %v649 = vpop.permute.xlu0 %648
    %v651 = vmul.f32 %v649, %v646
    %v652 = vadd.f32 %v643, %v651
    %s653 = scalar_lea.vmem [#allocation3], 32
    %654 = vst [vmem:[%s653] sm:$0xff] %v652
    %v655 = vld [vmem:[%s378] sm:$0xff]
    %657 = vset.pattern.permute.xlu0 0
    %658 = vperm.xlu0 %657, %v655
    %v659 = vpop.permute.xlu0 %658
    %v661 = vmul.f32 %v659, %v652
    %662 = vrot.lane.b32.xlu0 %v652, 127
    %v663 = vpop.permute.xlu0 %662
    %v664 = vmul.f32 %v663, %v222
    %665 = vset.pattern.permute.xlu0 1
    %666 = vperm.xlu0 %665, %v655
    %v667 = vpop.permute.xlu0 %666
    %v669 = vmul.f32 %v667, %v664
    %v670 = vadd.f32 %v661, %v669
    %671 = vrot.lane.b32.xlu0 %v652, 126
    %v672 = vpop.permute.xlu0 %671
    %v673 = vmul.f32 %v672, %v225
    %674 = vset.pattern.permute.xlu0 2
    %675 = vperm.xlu0 %674, %v655
    %v676 = vpop.permute.xlu0 %675
    %v678 = vmul.f32 %v676, %v673
    %v679 = vadd.f32 %v670, %v678
    %680 = vrot.lane.b32.xlu0 %v652, 125
    %v681 = vpop.permute.xlu0 %680
    %v682 = vmul.f32 %v681, %v228
    %683 = vset.pattern.permute.xlu0 3
    %684 = vperm.xlu0 %683, %v655
    %v685 = vpop.permute.xlu0 %684
    %v687 = vmul.f32 %v685, %v682
    %v688 = vadd.f32 %v679, %v687
    %s689 = scalar_lea.vmem [#allocation3], 24
    %690 = vst [vmem:[%s689] sm:$0xff] %v688
    %v691 = vld [vmem:[%s341] sm:$0xff]
    %693 = vset.pattern.permute.xlu0 0
    %694 = vperm.xlu0 %693, %v691
    %v695 = vpop.permute.xlu0 %694
    %v697 = vmul.f32 %v695, %v688
    %698 = vrot.lane.b32.xlu0 %v688, 127
    %v699 = vpop.permute.xlu0 %698
    %v700 = vmul.f32 %v699, %v222
    %701 = vset.pattern.permute.xlu0 1
    %702 = vperm.xlu0 %701, %v691
    %v703 = vpop.permute.xlu0 %702
    %v705 = vmul.f32 %v703, %v700
    %v706 = vadd.f32 %v697, %v705
    %707 = vrot.lane.b32.xlu0 %v688, 126
    %v708 = vpop.permute.xlu0 %707
    %v709 = vmul.f32 %v708, %v225
    %710 = vset.pattern.permute.xlu0 2
    %711 = vperm.xlu0 %710, %v691
    %v712 = vpop.permute.xlu0 %711
    %v714 = vmul.f32 %v712, %v709
    %v715 = vadd.f32 %v706, %v714
    %716 = vrot.lane.b32.xlu0 %v688, 125
    %v717 = vpop.permute.xlu0 %716
    %v718 = vmul.f32 %v717, %v228
    %719 = vset.pattern.permute.xlu0 3
    %720 = vperm.xlu0 %719, %v691
    %v721 = vpop.permute.xlu0 %720
    %v723 = vmul.f32 %v721, %v718
    %v724 = vadd.f32 %v715, %v723
    %s725 = scalar_lea.vmem [#allocation3], 16
    %726 = vst [vmem:[%s725] sm:$0xff] %v724
    %v727 = vld [vmem:[%s304] sm:$0xff]
    %729 = vset.pattern.permute.xlu0 0
    %730 = vperm.xlu0 %729, %v727
    %v731 = vpop.permute.xlu0 %730
    %v733 = vmul.f32 %v731, %v724
    %734 = vrot.lane.b32.xlu0 %v724, 127
    %v735 = vpop.permute.xlu0 %734
    %v736 = vmul.f32 %v735, %v222
    %737 = vset.pattern.permute.xlu0 1
    %738 = vperm.xlu0 %737, %v727
    %v739 = vpop.permute.xlu0 %738
    %v741 = vmul.f32 %v739, %v736
    %v742 = vadd.f32 %v733, %v741
    %743 = vrot.lane.b32.xlu0 %v724, 126
    %v744 = vpop.permute.xlu0 %743
    %v745 = vmul.f32 %v744, %v225
    %746 = vset.pattern.permute.xlu0 2
    %747 = vperm.xlu0 %746, %v727
    %v748 = vpop.permute.xlu0 %747
    %v750 = vmul.f32 %v748, %v745
    %v751 = vadd.f32 %v742, %v750
    %752 = vrot.lane.b32.xlu0 %v724, 125
    %v753 = vpop.permute.xlu0 %752
    %v754 = vmul.f32 %v753, %v228
    %755 = vset.pattern.permute.xlu0 3
    %756 = vperm.xlu0 %755, %v727
    %v757 = vpop.permute.xlu0 %756
    %v759 = vmul.f32 %v757, %v754
    %v760 = vadd.f32 %v751, %v759
    %s761 = scalar_lea.vmem [#allocation3], 8
    %762 = vst [vmem:[%s761] sm:$0xff] %v760
    %v763 = vld [vmem:[%s267] sm:$0xff]
    %765 = vset.pattern.permute.xlu0 0
    %766 = vperm.xlu0 %765, %v763
    %v767 = vpop.permute.xlu0 %766
    %v769 = vmul.f32 %v767, %v760
    %770 = vrot.lane.b32.xlu0 %v760, 127
    %v771 = vpop.permute.xlu0 %770
    %v772 = vmul.f32 %v771, %v222
    %773 = vset.pattern.permute.xlu0 1
    %774 = vperm.xlu0 %773, %v763
    %v775 = vpop.permute.xlu0 %774
    %v777 = vmul.f32 %v775, %v772
    %v778 = vadd.f32 %v769, %v777
    %779 = vrot.lane.b32.xlu0 %v760, 126
    %v780 = vpop.permute.xlu0 %779
    %v781 = vmul.f32 %v780, %v225
    %782 = vset.pattern.permute.xlu0 2
    %783 = vperm.xlu0 %782, %v763
    %v784 = vpop.permute.xlu0 %783
    %v786 = vmul.f32 %v784, %v781
    %v787 = vadd.f32 %v778, %v786
    %788 = vrot.lane.b32.xlu0 %v760, 125
    %v789 = vpop.permute.xlu0 %788
    %v790 = vmul.f32 %v789, %v228
    %791 = vset.pattern.permute.xlu0 3
    %792 = vperm.xlu0 %791, %v763
    %v793 = vpop.permute.xlu0 %792
    %v795 = vmul.f32 %v793, %v790
    %v796 = vadd.f32 %v787, %v795
    %797 = vst [vmem:[#allocation3] sm:$0xff] %v796
    %v798 = vld [vmem:[#allocation2] sm:$0xff]
    %v799 = vld [vmem:[#allocation2 + $0x8] sm:$0xff]
    %v800 = vld [vmem:[#allocation2 + $0x10] sm:$0xff]
    %v801 = vld [vmem:[#allocation2 + $0x18] sm:$0xff]
    %v802 = vld [vmem:[#allocation2 + $0x20] sm:$0xff]
    %v803 = vld [vmem:[#allocation2 + $0x28] sm:$0xff]
    %v804 = vld [vmem:[#allocation2 + $0x30] sm:$0xff]
    %v805 = vld [vmem:[#allocation2 + $0x38] sm:$0xff]
    %v806 = vld [vmem:[#allocation3] sm:$0xff]
    %v807 = vld [vmem:[#allocation3 + $0x8] sm:$0xff]
    %v808 = vld [vmem:[#allocation3 + $0x10] sm:$0xff]
    %v809 = vld [vmem:[#allocation3 + $0x18] sm:$0xff]
    %v810 = vld [vmem:[#allocation3 + $0x20] sm:$0xff]
    %v811 = vld [vmem:[#allocation3 + $0x28] sm:$0xff]
    %v812 = vld [vmem:[#allocation3 + $0x30] sm:$0xff]
    %v813 = vld [vmem:[#allocation3 + $0x38] sm:$0xff]
    %v814 = vld [vmem:[%s3] sm:$0xff]
    %v815 = vld [vmem:[%s3 + $0x8] sm:$0xff]
    %v816 = vld [vmem:[%s3 + $0x10] sm:$0xff]
    %v817 = vld [vmem:[%s3 + $0x18] sm:$0xff]
    %v818 = vld [vmem:[%s3 + $0x20] sm:$0xff]
    %v819 = vld [vmem:[%s3 + $0x28] sm:$0xff]
    %v820 = vld [vmem:[%s3 + $0x30] sm:$0xff]
    %v821 = vld [vmem:[%s3 + $0x38] sm:$0xff]
    %822 = vrot.lane.b32.xlu0 %v798, 3
    %v823 = vpop.permute.xlu0 %822
    %824 = vrot.lane.b32.xlu0 %v799, 3
    %v825 = vpop.permute.xlu0 %824
    %826 = vrot.lane.b32.xlu0 %v800, 3
    %v827 = vpop.permute.xlu0 %826
    %828 = vrot.lane.b32.xlu0 %v801, 3
    %v829 = vpop.permute.xlu0 %828
    %830 = vrot.lane.b32.xlu0 %v802, 3
    %v831 = vpop.permute.xlu0 %830
    %832 = vrot.lane.b32.xlu0 %v803, 3
    %v833 = vpop.permute.xlu0 %832
    %834 = vrot.lane.b32.xlu0 %v804, 3
    %v835 = vpop.permute.xlu0 %834
    %836 = vrot.lane.b32.xlu0 %v805, 3
    %v837 = vpop.permute.xlu0 %836
    %v838 = vmul.f32 %v823, %v219
    %v839 = vmul.f32 %v825, %v219
    %v840 = vmul.f32 %v827, %v219
    %v841 = vmul.f32 %v829, %v219
    %v842 = vmul.f32 %v831, %v219
    %v843 = vmul.f32 %v833, %v219
    %v844 = vmul.f32 %v835, %v219
    %v845 = vmul.f32 %v837, %v219
    %v846 = vmul.f32 %v838, 0.0
    %v847 = vmul.f32 %v839, 0.0
    %v848 = vmul.f32 %v840, 0.0
    %v849 = vmul.f32 %v841, 0.0
    %v850 = vmul.f32 %v842, 0.0
    %v851 = vmul.f32 %v843, 0.0
    %v852 = vmul.f32 %v844, 0.0
    %v853 = vmul.f32 %v845, 0.0
    %s854 = scalar_lea.vmem [#allocation4], 192
    %855 = vst [vmem:[%s854] sm:$0xff] %v846
    %856 = vst [vmem:[%s854 + $0x8] sm:$0xff] %v847
    %857 = vst [vmem:[%s854 + $0x10] sm:$0xff] %v848
    %858 = vst [vmem:[%s854 + $0x18] sm:$0xff] %v849
    %859 = vst [vmem:[%s854 + $0x20] sm:$0xff] %v850
    %860 = vst [vmem:[%s854 + $0x28] sm:$0xff] %v851
    %861 = vst [vmem:[%s854 + $0x30] sm:$0xff] %v852
    %862 = vst [vmem:[%s854 + $0x38] sm:$0xff] %v853
    %v863 = vadd.f32 %v846, 0.0
    %v864 = vadd.f32 %v847, 0.0
    %v865 = vadd.f32 %v848, 0.0
    %v866 = vadd.f32 %v849, 0.0
    %v867 = vadd.f32 %v850, 0.0
    %v868 = vadd.f32 %v851, 0.0
    %v869 = vadd.f32 %v852, 0.0
    %v870 = vadd.f32 %v853, 0.0
    %v871 = vadd.f32 %v846, %v847
    %v872 = vadd.f32 %v871, %v848
    %v873 = vadd.f32 %v872, %v849
    %v874 = vadd.f32 %v873, %v850
    %v875 = vadd.f32 %v874, %v851
    %v876 = vadd.f32 %v875, %v852
    %v877 = vadd.f32 %v876, %v853
    %v878 = vadd.f32 %v877, 0.0
    %880 = vset.pattern.permute.xlu0 3
    %881 = vperm.xlu0 %880, %v814
    %v882 = vpop.permute.xlu0 %881
    %885 = vset.pattern.permute.xlu0 3
    %886 = vperm.xlu0 %885, %v815
    %v887 = vpop.permute.xlu0 %886
    %890 = vset.pattern.permute.xlu0 3
    %891 = vperm.xlu0 %890, %v816
    %v892 = vpop.permute.xlu0 %891
    %895 = vset.pattern.permute.xlu0 3
    %896 = vperm.xlu0 %895, %v817
    %v897 = vpop.permute.xlu0 %896
    %900 = vset.pattern.permute.xlu0 3
    %901 = vperm.xlu0 %900, %v818
    %v902 = vpop.permute.xlu0 %901
    %905 = vset.pattern.permute.xlu0 3
    %906 = vperm.xlu0 %905, %v819
    %v907 = vpop.permute.xlu0 %906
    %910 = vset.pattern.permute.xlu0 3
    %911 = vperm.xlu0 %910, %v820
    %v912 = vpop.permute.xlu0 %911
    %915 = vset.pattern.permute.xlu0 3
    %916 = vperm.xlu0 %915, %v821
    %v917 = vpop.permute.xlu0 %916
    %v919 = vmul.f32 %v882, %v806
    %v920 = vmul.f32 %v887, %v807
    %v921 = vmul.f32 %v892, %v808
    %v922 = vmul.f32 %v897, %v809
    %v923 = vmul.f32 %v902, %v810
    %v924 = vmul.f32 %v907, %v811
    %v925 = vmul.f32 %v912, %v812
    %v926 = vmul.f32 %v917, %v813
    %v927 = vadd.f32 %v919, 0.0
    %v928 = vadd.f32 %v920, 0.0
    %v929 = vadd.f32 %v921, 0.0
    %v930 = vadd.f32 %v922, 0.0
    %v931 = vadd.f32 %v923, 0.0
    %v932 = vadd.f32 %v924, 0.0
    %v933 = vadd.f32 %v925, 0.0
    %v934 = vadd.f32 %v926, 0.0
    %935 = vrot.lane.b32.xlu0 %v927, 127
    %v936 = vpop.permute.xlu0 %935
    %937 = vrot.lane.b32.xlu0 %v928, 127
    %v938 = vpop.permute.xlu0 %937
    %939 = vrot.lane.b32.xlu0 %v929, 127
    %v940 = vpop.permute.xlu0 %939
    %941 = vrot.lane.b32.xlu0 %v930, 127
    %v942 = vpop.permute.xlu0 %941
    %943 = vrot.lane.b32.xlu0 %v931, 127
    %v944 = vpop.permute.xlu0 %943
    %945 = vrot.lane.b32.xlu0 %v932, 127
    %v946 = vpop.permute.xlu0 %945
    %947 = vrot.lane.b32.xlu0 %v933, 127
    %v948 = vpop.permute.xlu0 %947
    %949 = vrot.lane.b32.xlu0 %v934, 127
    %v950 = vpop.permute.xlu0 %949
    %v951 = vmul.f32 %v936, %v222
    %v952 = vmul.f32 %v938, %v222
    %v953 = vmul.f32 %v940, %v222
    %v954 = vmul.f32 %v942, %v222
    %v955 = vmul.f32 %v944, %v222
    %v956 = vmul.f32 %v946, %v222
    %v957 = vmul.f32 %v948, %v222
    %v958 = vmul.f32 %v950, %v222
    %959 = vrot.lane.b32.xlu0 %v798, 2
    %v960 = vpop.permute.xlu0 %959
    %961 = vrot.lane.b32.xlu0 %v799, 2
    %v962 = vpop.permute.xlu0 %961
    %963 = vrot.lane.b32.xlu0 %v800, 2
    %v964 = vpop.permute.xlu0 %963
    %965 = vrot.lane.b32.xlu0 %v801, 2
    %v966 = vpop.permute.xlu0 %965
    %967 = vrot.lane.b32.xlu0 %v802, 2
    %v968 = vpop.permute.xlu0 %967
    %969 = vrot.lane.b32.xlu0 %v803, 2
    %v970 = vpop.permute.xlu0 %969
    %971 = vrot.lane.b32.xlu0 %v804, 2
    %v972 = vpop.permute.xlu0 %971
    %973 = vrot.lane.b32.xlu0 %v805, 2
    %v974 = vpop.permute.xlu0 %973
    %v975 = vmul.f32 %v960, %v216
    %v976 = vmul.f32 %v962, %v216
    %v977 = vmul.f32 %v964, %v216
    %v978 = vmul.f32 %v966, %v216
    %v979 = vmul.f32 %v968, %v216
    %v980 = vmul.f32 %v970, %v216
    %v981 = vmul.f32 %v972, %v216
    %v982 = vmul.f32 %v974, %v216
    %v983 = vmul.f32 %v975, %v951
    %v984 = vmul.f32 %v976, %v952
    %v985 = vmul.f32 %v977, %v953
    %v986 = vmul.f32 %v978, %v954
    %v987 = vmul.f32 %v979, %v955
    %v988 = vmul.f32 %v980, %v956
    %v989 = vmul.f32 %v981, %v957
    %v990 = vmul.f32 %v982, %v958
    %s991 = scalar_lea.vmem [#allocation4], 128
    %992 = vst [vmem:[%s991] sm:$0xff] %v983
    %993 = vst [vmem:[%s991 + $0x8] sm:$0xff] %v984
    %994 = vst [vmem:[%s991 + $0x10] sm:$0xff] %v985
    %995 = vst [vmem:[%s991 + $0x18] sm:$0xff] %v986
    %996 = vst [vmem:[%s991 + $0x20] sm:$0xff] %v987
    %997 = vst [vmem:[%s991 + $0x28] sm:$0xff] %v988
    %998 = vst [vmem:[%s991 + $0x30] sm:$0xff] %v989
    %999 = vst [vmem:[%s991 + $0x38] sm:$0xff] %v990
    %v1000 = vadd.f32 %v863, %v983
    %v1001 = vadd.f32 %v864, %v984
    %v1002 = vadd.f32 %v865, %v985
    %v1003 = vadd.f32 %v866, %v986
    %v1004 = vadd.f32 %v867, %v987
    %v1005 = vadd.f32 %v868, %v988
    %v1006 = vadd.f32 %v869, %v989
    %v1007 = vadd.f32 %v870, %v990
    %v1008 = vadd.f32 %v983, %v984
    %v1009 = vadd.f32 %v1008, %v985
    %v1010 = vadd.f32 %v1009, %v986
    %v1011 = vadd.f32 %v1010, %v987
    %v1012 = vadd.f32 %v1011, %v988
    %v1013 = vadd.f32 %v1012, %v989
    %v1014 = vadd.f32 %v1013, %v990
    %v1015 = vadd.f32 %v1014, 0.0
    %1016 = vset.pattern.permute.xlu0 2
    %1017 = vperm.xlu0 %1016, %v814
    %v1018 = vpop.permute.xlu0 %1017
    %1020 = vset.pattern.permute.xlu0 2
    %1021 = vperm.xlu0 %1020, %v815
    %v1022 = vpop.permute.xlu0 %1021
    %1024 = vset.pattern.permute.xlu0 2
    %1025 = vperm.xlu0 %1024, %v816
    %v1026 = vpop.permute.xlu0 %1025
    %1028 = vset.pattern.permute.xlu0 2
    %1029 = vperm.xlu0 %1028, %v817
    %v1030 = vpop.permute.xlu0 %1029
    %1032 = vset.pattern.permute.xlu0 2
    %1033 = vperm.xlu0 %1032, %v818
    %v1034 = vpop.permute.xlu0 %1033
    %1036 = vset.pattern.permute.xlu0 2
    %1037 = vperm.xlu0 %1036, %v819
    %v1038 = vpop.permute.xlu0 %1037
    %1040 = vset.pattern.permute.xlu0 2
    %1041 = vperm.xlu0 %1040, %v820
    %v1042 = vpop.permute.xlu0 %1041
    %1044 = vset.pattern.permute.xlu0 2
    %1045 = vperm.xlu0 %1044, %v821
    %v1046 = vpop.permute.xlu0 %1045
    %v1048 = vmul.f32 %v1018, %v806
    %v1049 = vmul.f32 %v1022, %v807
    %v1050 = vmul.f32 %v1026, %v808
    %v1051 = vmul.f32 %v1030, %v809
    %v1052 = vmul.f32 %v1034, %v810
    %v1053 = vmul.f32 %v1038, %v811
    %v1054 = vmul.f32 %v1042, %v812
    %v1055 = vmul.f32 %v1046, %v813
    %v1056 = vadd.f32 %v1048, %v951
    %v1057 = vadd.f32 %v1049, %v952
    %v1058 = vadd.f32 %v1050, %v953
    %v1059 = vadd.f32 %v1051, %v954
    %v1060 = vadd.f32 %v1052, %v955
    %v1061 = vadd.f32 %v1053, %v956
    %v1062 = vadd.f32 %v1054, %v957
    %v1063 = vadd.f32 %v1055, %v958
    %1064 = vrot.lane.b32.xlu0 %v1056, 127
    %v1065 = vpop.permute.xlu0 %1064
    %1066 = vrot.lane.b32.xlu0 %v1057, 127
    %v1067 = vpop.permute.xlu0 %1066
    %1068 = vrot.lane.b32.xlu0 %v1058, 127
    %v1069 = vpop.permute.xlu0 %1068
    %1070 = vrot.lane.b32.xlu0 %v1059, 127
    %v1071 = vpop.permute.xlu0 %1070
    %1072 = vrot.lane.b32.xlu0 %v1060, 127
    %v1073 = vpop.permute.xlu0 %1072
    %1074 = vrot.lane.b32.xlu0 %v1061, 127
    %v1075 = vpop.permute.xlu0 %1074
    %1076 = vrot.lane.b32.xlu0 %v1062, 127
    %v1077 = vpop.permute.xlu0 %1076
    %1078 = vrot.lane.b32.xlu0 %v1063, 127
    %v1079 = vpop.permute.xlu0 %1078
    %v1080 = vmul.f32 %v1065, %v222
    %v1081 = vmul.f32 %v1067, %v222
    %v1082 = vmul.f32 %v1069, %v222
    %v1083 = vmul.f32 %v1071, %v222
    %v1084 = vmul.f32 %v1073, %v222
    %v1085 = vmul.f32 %v1075, %v222
    %v1086 = vmul.f32 %v1077, %v222
    %v1087 = vmul.f32 %v1079, %v222
    %1088 = vrot.lane.b32.xlu0 %v798, 1
    %v1089 = vpop.permute.xlu0 %1088
    %1090 = vrot.lane.b32.xlu0 %v799, 1
    %v1091 = vpop.permute.xlu0 %1090
    %1092 = vrot.lane.b32.xlu0 %v800, 1
    %v1093 = vpop.permute.xlu0 %1092
    %1094 = vrot.lane.b32.xlu0 %v801, 1
    %v1095 = vpop.permute.xlu0 %1094
    %1096 = vrot.lane.b32.xlu0 %v802, 1
    %v1097 = vpop.permute.xlu0 %1096
    %1098 = vrot.lane.b32.xlu0 %v803, 1
    %v1099 = vpop.permute.xlu0 %1098
    %1100 = vrot.lane.b32.xlu0 %v804, 1
    %v1101 = vpop.permute.xlu0 %1100
    %1102 = vrot.lane.b32.xlu0 %v805, 1
    %v1103 = vpop.permute.xlu0 %1102
    %v1104 = vmul.f32 %v1089, %v213
    %v1105 = vmul.f32 %v1091, %v213
    %v1106 = vmul.f32 %v1093, %v213
    %v1107 = vmul.f32 %v1095, %v213
    %v1108 = vmul.f32 %v1097, %v213
    %v1109 = vmul.f32 %v1099, %v213
    %v1110 = vmul.f32 %v1101, %v213
    %v1111 = vmul.f32 %v1103, %v213
    %v1112 = vmul.f32 %v1104, %v1080
    %v1113 = vmul.f32 %v1105, %v1081
    %v1114 = vmul.f32 %v1106, %v1082
    %v1115 = vmul.f32 %v1107, %v1083
    %v1116 = vmul.f32 %v1108, %v1084
    %v1117 = vmul.f32 %v1109, %v1085
    %v1118 = vmul.f32 %v1110, %v1086
    %v1119 = vmul.f32 %v1111, %v1087
    %s1120 = scalar_lea.vmem [#allocation4], 64
    %1121 = vst [vmem:[%s1120] sm:$0xff] %v1112
    %1122 = vst [vmem:[%s1120 + $0x8] sm:$0xff] %v1113
    %1123 = vst [vmem:[%s1120 + $0x10] sm:$0xff] %v1114
    %1124 = vst [vmem:[%s1120 + $0x18] sm:$0xff] %v1115
    %1125 = vst [vmem:[%s1120 + $0x20] sm:$0xff] %v1116
    %1126 = vst [vmem:[%s1120 + $0x28] sm:$0xff] %v1117
    %1127 = vst [vmem:[%s1120 + $0x30] sm:$0xff] %v1118
    %1128 = vst [vmem:[%s1120 + $0x38] sm:$0xff] %v1119
    %v1129 = vadd.f32 %v1000, %v1112
    %v1130 = vadd.f32 %v1001, %v1113
    %v1131 = vadd.f32 %v1002, %v1114
    %v1132 = vadd.f32 %v1003, %v1115
    %v1133 = vadd.f32 %v1004, %v1116
    %v1134 = vadd.f32 %v1005, %v1117
    %v1135 = vadd.f32 %v1006, %v1118
    %v1136 = vadd.f32 %v1007, %v1119
    %v1137 = vadd.f32 %v1112, %v1113
    %v1138 = vadd.f32 %v1137, %v1114
    %v1139 = vadd.f32 %v1138, %v1115
    %v1140 = vadd.f32 %v1139, %v1116
    %v1141 = vadd.f32 %v1140, %v1117
    %v1142 = vadd.f32 %v1141, %v1118
    %v1143 = vadd.f32 %v1142, %v1119
    %v1144 = vadd.f32 %v1143, 0.0
    %1145 = vset.pattern.permute.xlu0 1
    %1146 = vperm.xlu0 %1145, %v814
    %v1147 = vpop.permute.xlu0 %1146
    %1149 = vset.pattern.permute.xlu0 1
    %1150 = vperm.xlu0 %1149, %v815
    %v1151 = vpop.permute.xlu0 %1150
    %1153 = vset.pattern.permute.xlu0 1
    %1154 = vperm.xlu0 %1153, %v816
    %v1155 = vpop.permute.xlu0 %1154
    %1157 = vset.pattern.permute.xlu0 1
    %1158 = vperm.xlu0 %1157, %v817
    %v1159 = vpop.permute.xlu0 %1158
    %1161 = vset.pattern.permute.xlu0 1
    %1162 = vperm.xlu0 %1161, %v818
    %v1163 = vpop.permute.xlu0 %1162
    %1165 = vset.pattern.permute.xlu0 1
    %1166 = vperm.xlu0 %1165, %v819
    %v1167 = vpop.permute.xlu0 %1166
    %1169 = vset.pattern.permute.xlu0 1
    %1170 = vperm.xlu0 %1169, %v820
    %v1171 = vpop.permute.xlu0 %1170
    %1173 = vset.pattern.permute.xlu0 1
    %1174 = vperm.xlu0 %1173, %v821
    %v1175 = vpop.permute.xlu0 %1174
    %v1177 = vmul.f32 %v1147, %v806
    %v1178 = vmul.f32 %v1151, %v807
    %v1179 = vmul.f32 %v1155, %v808
    %v1180 = vmul.f32 %v1159, %v809
    %v1181 = vmul.f32 %v1163, %v810
    %v1182 = vmul.f32 %v1167, %v811
    %v1183 = vmul.f32 %v1171, %v812
    %v1184 = vmul.f32 %v1175, %v813
    %v1185 = vadd.f32 %v1177, %v1080
    %v1186 = vadd.f32 %v1178, %v1081
    %v1187 = vadd.f32 %v1179, %v1082
    %v1188 = vadd.f32 %v1180, %v1083
    %v1189 = vadd.f32 %v1181, %v1084
    %v1190 = vadd.f32 %v1182, %v1085
    %v1191 = vadd.f32 %v1183, %v1086
    %v1192 = vadd.f32 %v1184, %v1087
    %1193 = vrot.lane.b32.xlu0 %v1185, 127
    %v1194 = vpop.permute.xlu0 %1193
    %1195 = vrot.lane.b32.xlu0 %v1186, 127
    %v1196 = vpop.permute.xlu0 %1195
    %1197 = vrot.lane.b32.xlu0 %v1187, 127
    %v1198 = vpop.permute.xlu0 %1197
    %1199 = vrot.lane.b32.xlu0 %v1188, 127
    %v1200 = vpop.permute.xlu0 %1199
    %1201 = vrot.lane.b32.xlu0 %v1189, 127
    %v1202 = vpop.permute.xlu0 %1201
    %1203 = vrot.lane.b32.xlu0 %v1190, 127
    %v1204 = vpop.permute.xlu0 %1203
    %1205 = vrot.lane.b32.xlu0 %v1191, 127
    %v1206 = vpop.permute.xlu0 %1205
    %1207 = vrot.lane.b32.xlu0 %v1192, 127
    %v1208 = vpop.permute.xlu0 %1207
    %v1209 = vmul.f32 %v1194, %v222
    %v1210 = vmul.f32 %v1196, %v222
    %v1211 = vmul.f32 %v1198, %v222
    %v1212 = vmul.f32 %v1200, %v222
    %v1213 = vmul.f32 %v1202, %v222
    %v1214 = vmul.f32 %v1204, %v222
    %v1215 = vmul.f32 %v1206, %v222
    %v1216 = vmul.f32 %v1208, %v222
    %v1217 = vmul.f32 %v798, %v1209
    %v1218 = vmul.f32 %v799, %v1210
    %v1219 = vmul.f32 %v800, %v1211
    %v1220 = vmul.f32 %v801, %v1212
    %v1221 = vmul.f32 %v802, %v1213
    %v1222 = vmul.f32 %v803, %v1214
    %v1223 = vmul.f32 %v804, %v1215
    %v1224 = vmul.f32 %v805, %v1216
    %1225 = vst [vmem:[#allocation4] sm:$0xff] %v1217
    %1226 = vst [vmem:[#allocation4 + $0x8] sm:$0xff] %v1218
    %1227 = vst [vmem:[#allocation4 + $0x10] sm:$0xff] %v1219
    %1228 = vst [vmem:[#allocation4 + $0x18] sm:$0xff] %v1220
    %1229 = vst [vmem:[#allocation4 + $0x20] sm:$0xff] %v1221
    %1230 = vst [vmem:[#allocation4 + $0x28] sm:$0xff] %v1222
    %1231 = vst [vmem:[#allocation4 + $0x30] sm:$0xff] %v1223
    %1232 = vst [vmem:[#allocation4 + $0x38] sm:$0xff] %v1224
    %v1233 = vadd.f32 %v1129, %v1217
    %v1234 = vadd.f32 %v1130, %v1218
    %v1235 = vadd.f32 %v1131, %v1219
    %v1236 = vadd.f32 %v1132, %v1220
    %v1237 = vadd.f32 %v1133, %v1221
    %v1238 = vadd.f32 %v1134, %v1222
    %v1239 = vadd.f32 %v1135, %v1223
    %v1240 = vadd.f32 %v1136, %v1224
    %v1241 = vadd.f32 %v1217, %v1218
    %v1242 = vadd.f32 %v1241, %v1219
    %v1243 = vadd.f32 %v1242, %v1220
    %v1244 = vadd.f32 %v1243, %v1221
    %v1245 = vadd.f32 %v1244, %v1222
    %v1246 = vadd.f32 %v1245, %v1223
    %v1247 = vadd.f32 %v1246, %v1224
    %v1248 = vadd.f32 %v1247, 0.0
    %1249 = vst [vmem:[#allocation6] sm:$0xff] %v1233
    %1250 = vst [vmem:[#allocation6 + $0x8] sm:$0xff] %v1234
    %1251 = vst [vmem:[#allocation6 + $0x10] sm:$0xff] %v1235
    %1252 = vst [vmem:[#allocation6 + $0x18] sm:$0xff] %v1236
    %1253 = vst [vmem:[#allocation6 + $0x20] sm:$0xff] %v1237
    %1254 = vst [vmem:[#allocation6 + $0x28] sm:$0xff] %v1238
    %1255 = vst [vmem:[#allocation6 + $0x30] sm:$0xff] %v1239
    %1256 = vst [vmem:[#allocation6 + $0x38] sm:$0xff] %v1240
    %1257 = vst [vmem:[#allocation8] sm:$0xff] %v1248
    %s1258 = scalar_lea.vmem [#allocation8], 8
    %1259 = vst [vmem:[%s1258] sm:$0xff] %v1144
    %s1260 = scalar_lea.vmem [#allocation8], 16
    %1261 = vst [vmem:[%s1260] sm:$0xff] %v1015
    %s1262 = scalar_lea.vmem [#allocation8], 24
    %1263 = vst [vmem:[%s1262] sm:$0xff] %v878
    // Predicated region
    $region14: #{tpu_custom_call.1} parent=1 // pred_check
      _
    $region15: #{tpu_custom_call.1} parent=1 // pred_check_branch
      %1265 = sbr.rel (0) target = $region17
    $region16: #{tpu_custom_call.1} parent=1 // pred_region
      _
    $region17: #{tpu_custom_call.1} parent=1 // pred_fallthru
      _
    // Predicated region
    $region18: #{tpu_custom_call.1} parent=1 // pred_check
      _
    $region19: #{tpu_custom_call.1} parent=1 // pred_check_branch
      %1267 = sbr.rel (0) target = $region21
    $region20: #{tpu_custom_call.1} parent=1 // pred_region
      %s1269 = ssub.s32 4096, 4096
      %1270 = vsyncadd [#allocation5], %s1269
      %s1271 = sshll.u32 [#allocation4], 4
      %s1272 = int_to_ptr.vmem [resolvable:$true] %s1271
      %1277 = dma.vmem_to_hbm [thread:$0]  %s1272, 4096, %s4, [#allocation5], 128, 128, 8
    $region21: #{tpu_custom_call.1} parent=1 // pred_fallthru
      _
    // Predicated region
    $region22: #{tpu_custom_call.1} parent=1 // pred_check
      _
    $region23: #{tpu_custom_call.1} parent=1 // pred_check_branch
      %1279 = sbr.rel (0) target = $region25
    $region24: #{tpu_custom_call.1} parent=1 // pred_region
      %s1281 = ssub.s32 1024, 1024
      %1282 = vsyncadd [#allocation7], %s1281
      %s1283 = sshll.u32 [#allocation6], 4
      %s1284 = int_to_ptr.vmem [resolvable:$true] %s1283
      %1289 = dma.vmem_to_hbm [thread:$0]  %s1284, 1024, %s5, [#allocation7], 128, 128, 8
    $region25: #{tpu_custom_call.1} parent=1 // pred_fallthru
      _
    // Predicated region
    $region26: #{tpu_custom_call.1} parent=1 // pred_check
      _
    $region27: #{tpu_custom_call.1} parent=1 // pred_check_branch
      %1291 = sbr.rel (0) target = $region29
    $region28: #{tpu_custom_call.1} parent=1 // pred_region
      %s1293 = ssub.s32 512, 512
      %1294 = vsyncadd [#allocation7], %s1293
      %s1295 = sshll.u32 [#allocation8], 4
      %s1296 = int_to_ptr.vmem [resolvable:$true] %s1295
      %1301 = dma.vmem_to_hbm [thread:$0]  %s1296, 512, %s6, [#allocation7], 128, 128, 8
    $region29: #{tpu_custom_call.1} parent=1 // pred_fallthru
      _
    // Predicated region
    $region30: #{tpu_custom_call.1} parent=1 // pred_check
      _
    $region31: #{tpu_custom_call.1} parent=1 // pred_check_branch
      %1303 = sbr.rel (0) target = $region33
    $region32: #{tpu_custom_call.1} parent=1 // pred_region
      _
    $region33: #{tpu_custom_call.1} parent=1 // pred_fallthru
      _
    // Predicated region
    $region34: #{tpu_custom_call.1} parent=1 // pred_check
      _
    $region35: #{tpu_custom_call.1} parent=1 // pred_check_branch
      %1305 = sbr.rel (0) target = $region37
    $region36: #{tpu_custom_call.1} parent=1 // pred_region
      _
    $region37: #{tpu_custom_call.1} parent=1 // pred_fallthru
      _
    // Predicated region
    $region38: #{tpu_custom_call.1} parent=1 // pred_check
      _
    $region39: #{tpu_custom_call.1} parent=1 // pred_check_branch
      %1307 = sbr.rel (0) target = $region41
    $region40: #{tpu_custom_call.1} parent=1 // pred_region
      %1308 = dma.done [#allocation5], 4096
    $region41: #{tpu_custom_call.1} parent=1 // pred_fallthru
      _
    // Predicated region
    $region42: #{tpu_custom_call.1} parent=1 // pred_check
      _
    $region43: #{tpu_custom_call.1} parent=1 // pred_check_branch
      %1310 = sbr.rel (0) target = $region45
    $region44: #{tpu_custom_call.1} parent=1 // pred_region
      %1311 = dma.done [#allocation7], 1024
    $region45: #{tpu_custom_call.1} parent=1 // pred_fallthru
      _
    // Predicated region
    $region46: #{tpu_custom_call.1} parent=1 // pred_check
      _
    $region47: #{tpu_custom_call.1} parent=1 // pred_check_branch
      %1313 = sbr.rel (0) target = $region49
    $region48: #{tpu_custom_call.1} parent=1 // pred_region
      %1314 = dma.done [#allocation7], 512
    $region49: #{tpu_custom_call.1} parent=1 // pred_fallthru
      _
    // Predicated region
    $region50: #{tpu_custom_call.1} parent=1 // pred_check
      _
    $region51: #{tpu_custom_call.1} parent=1 // pred_check_branch
      %1316 = sbr.rel (0) target = $region53
    $region52: #{tpu_custom_call.1} parent=1 // pred_region
      _
    $region53: #{tpu_custom_call.1} parent=1 // pred_fallthru
      _
    %1317 = vsyncpa [#allocation5], 1
    %1318 = vsyncpa [#allocation7], 1

</llo_original>
